<compile_context>
chip_gen: v7x
topology: tpu7x:2x2x1
jax: 0.10.0
libtpu: 0.0.40
codegen_flags: <defaults>
</compile_context>

<pallas_src>
import functools
import math

import jax
import jax.numpy as jnp
import numpy as np
from jax.experimental import pallas as pl
from jax.experimental.pallas import tpu as pltpu


# ----------------------------- kernel ------------------------------------

_SQRT_HALF = 1.0 / math.sqrt(2.0)


def _gelu_exact(x, out_dtype):
    # Matches torch.nn.GELU() default (approximate='none'): erf-based GELU.
    # The downcast to the matmul dtype is fused into the same VPU pass.
    return (0.5 * x * (1.0 + jax.lax.erf(x * _SQRT_HALF))).astype(out_dtype)


def _gelu_tanh(x, out_dtype):
    # Fast path: tanh GELU lands in the EUP slot instead of a VALU erf
    # polynomial.  NOT bit-matching torch.nn.GELU(approximate='none');
    # keep disabled for validation (gated by approx_gelu flag).
    c = math.sqrt(2.0 / math.pi)
    return (0.5 * x * (1.0 + jnp.tanh(c * (x + 0.044715 * x * x * x)))
            ).astype(out_dtype)


def _fused_mlp_kernel(*refs, approx_gelu=False):
    """refs = (t_ref, w0, b0, w1, b1, ..., w5, b5, o_ref).

    t_ref: [TN, 1] f32.  w0/b0 are f32 (layer 0 is a VPU broadcast, no MXU).
    Hidden / final weights are bf16; dots accumulate in f32; bias add + GELU
    run in f32 and emit bf16 directly (single VPU pass per layer).
    """
    t_ref, o_ref = refs[0], refs[-1]
    wb = refs[1:-1]
    n_layers = len(wb) // 2
    gelu = _gelu_tanh if approx_gelu else _gelu_exact

    mm_dtype = wb[2].dtype                              # hidden-weight dtype (bf16)

    # Layer 0: in_features == 1 -> broadcast outer product, stays on the VPU.
    x = t_ref[...]                                      # [TN, 1]   f32
    h = gelu(x * wb[0][...] + wb[1][...], mm_dtype)     # [TN, 256] bf16

    # Hidden layers: [TN,256] x [256,256] bf16 MXU matmuls, f32 accumulate.
    for li in range(1, n_layers - 1):
        w, b = wb[2 * li], wb[2 * li + 1]
        h = gelu(jnp.dot(h, w[...], preferred_element_type=jnp.float32)
                 + b[...], mm_dtype)

    # Final layer: [TN,256] x [256,8], no activation, f32 output.
    w, b = wb[-2], wb[-1]
    o_ref[...] = jnp.dot(h, w[...], preferred_element_type=jnp.float32) + b[...]


# --------------------------- packing (run ONCE) ----------------------------


def _round_up(x, m):
    return pl.cdiv(x, m) * m


def _block_diag(mats, dtype):
    rows = sum(m.shape[0] for m in mats)
    cols = sum(m.shape[1] for m in mats)
    out = jnp.zeros((rows, cols), dtype)
    r = c = 0
    for m in mats:
        out = out.at[r:r + m.shape[0], c:c + m.shape[1]].set(m.astype(dtype))
        r += m.shape[0]
        c += m.shape[1]
    return out


def pack_params(all_params, *, out_pad=8, matmul_dtype=jnp.bfloat16):
    """Pack four per-net parameter lists into one block-diagonal MLP.

    Call this ONCE at init (not per forward) and reuse the result: it emits a
    few dozen XLA ops that would otherwise dominate the ~40 MFLOP kernel.

    all_params: list of 4 param lists; each is [(w, b), ...] with w stored as
    [in_features, out_features] and b as [1, out_features] (PyTorch-transposed).
    Layer-0 params stay f32 (broadcast multiply, no MXU); hidden/final weights
    are cast to bf16; biases stay f32.
    """
    n_layers = len(all_params[0])
    packed = []

    # Layer 0: all nets have in_features == 1 -> concat along out axis.
    w0 = jnp.concatenate([p[0][0] for p in all_params], axis=1)  # [1, 256]
    b0 = jnp.concatenate([p[0][1] for p in all_params], axis=1)  # [1, 256]
    packed.append((w0.astype(jnp.float32), b0.astype(jnp.float32)))

    # Hidden layers: block-diagonal [256, 256].
    for li in range(1, n_layers - 1):
        w = _block_diag([p[li][0] for p in all_params], matmul_dtype)
        b = jnp.concatenate([p[li][1] for p in all_params],
                            axis=1).astype(jnp.float32)
        packed.append((w, b))

    # Final layer: block-diagonal [256, 3+1+1+1], lane-padded to `out_pad`.
    w_last = _block_diag([p[-1][0] for p in all_params], matmul_dtype)  # [256,6]
    b_last = jnp.concatenate([p[-1][1] for p in all_params],
                             axis=1).astype(jnp.float32)                # [1,6]
    pad = out_pad - w_last.shape[1]
    if pad > 0:
        w_last = jnp.pad(w_last, ((0, 0), (0, pad)))
        b_last = jnp.pad(b_last, ((0, 0), (0, pad)))
    packed.append((w_last, b_last))
    return packed


# ------------------------------ wrapper ------------------------------------


def fused_mlp_pallas(t, packed, *, tile_n=1024, approx_gelu=False):
    """Run the fused block-diagonal MLP.  t: [N, 1] f32 -> [N, out_pad] f32."""
    n = t.shape[0]
    out_dim = packed[-1][0].shape[1]
    hidden = packed[1][0].shape[0]
    n_gelu = len(packed) - 1
    n_hidden_dots = len(packed) - 2

    # Batch tile: multiple of 8 sublanes, capped by tile_n (1024 keeps live
    # activations + weights well under v7x's 64 MiB VMEM; v5e/v6e can pass a
    # larger tile_n to amortize the ~0.35us/step grid overhead).
    tn = int(min(tile_n, _round_up(n, 8)))
    # v7x megacore: once the batch is big enough, keep grid >= 2 so the
    # ("parallel",) axis can shard across the two TensorCores.
    if n >= 512 and pl.cdiv(n, tn) < 2:
        tn = int(min(tn, max(8, _round_up(pl.cdiv(n, 2), 8))))
    n_pad = int(_round_up(n, tn))
    t_p = jnp.pad(t, ((0, n_pad - n), (0, 0))) if n_pad != n else t

    flat_inputs = [t_p]
    in_specs = [pl.BlockSpec((tn, 1), lambda i: (i, 0))]
    for w, b in packed:
        flat_inputs += [w, b]
        # Weights/biases are grid-invariant: fetch once, single-buffered to
        # halve their resident VMEM.
        in_specs += [
            pl.BlockSpec(w.shape, lambda i: (0, 0), pipeline_mode=pl.Buffered(1)),
            pl.BlockSpec(b.shape, lambda i: (0, 0), pipeline_mode=pl.Buffered(1)),
        ]

    param_bytes = sum(int(w.size) * w.dtype.itemsize +
                      int(b.size) * b.dtype.itemsize for w, b in packed)
    cost = pl.CostEstimate(
        flops=2 * n_pad * hidden * (hidden * n_hidden_dots + out_dim),
        transcendentals=n_gelu * n_pad * hidden,
        bytes_accessed=param_bytes + n_pad * (4 + out_dim * 4),
    )

    out = pl.pallas_call(
        functools.partial(_fused_mlp_kernel, approx_gelu=approx_gelu),
        grid=(n_pad // tn,),
        in_specs=in_specs,
        out_specs=pl.BlockSpec((tn, out_dim), lambda i: (i, 0)),
        out_shape=jax.ShapeDtypeStruct((n_pad, out_dim), jnp.float32),
        compiler_params=pltpu.CompilerParams(
            dimension_semantics=("parallel",),        # megacore on v7x
            vmem_limit_bytes=32 * 1024 * 1024),       # sized for v7x 64 MiB
        cost_estimate=cost,
    )(*flat_inputs)
    return out[:n]


def pitlnn_forward(t, packed, *, tile_n=1024, approx_gelu=False):
    """Forward pass using pre-packed params (pack_params run once at init).

    Prefer consuming the [N,8] slab from fused_mlp_pallas directly inside a
    larger jit; this wrapper slices it into the module's 6-output signature.
    """
    out = fused_mlp_pallas(t, packed, tile_n=tile_n, approx_gelu=approx_gelu)
    y1 = out[:, 0:1]
    y2 = out[:, 1:2]
    y3 = out[:, 2:3]
    k1 = out[:, 3:4]
    k2 = out[:, 4:5]
    k3 = out[:, 5:6]
    return y1, y2, y3, k1, k2, k3


# ----------------------- parameter init & reference -----------------------


def init_mlp(key, layer_sizes):
    """Deterministic xavier-uniform weights, zero biases (synthetic init).

    Weights stored as [in_features, out_features] (transposed vs. PyTorch),
    biases as [1, out_features].
    """
    params = []
    keys = jax.random.split(key, len(layer_sizes) - 1)
    for i in range(len(layer_sizes) - 1):
        fan_in, fan_out = layer_sizes[i], layer_sizes[i + 1]
        limit = math.sqrt(6.0 / (fan_in + fan_out))
        w = jax.random.uniform(keys[i], (fan_in, fan_out), jnp.float32,
                               -limit, limit)
        b = jnp.zeros((1, fan_out), jnp.float32)
        params.append((w, b))
    return params


def _gelu_ref(x):
    return 0.5 * x * (1.0 + jax.lax.erf(x * _SQRT_HALF))


def mlp_ref(t, params):
    h = t
    for w, b in params[:-1]:
        h = _gelu_ref(jnp.dot(h, w, precision=jax.lax.Precision.HIGHEST) + b)
    w, b = params[-1]
    return jnp.dot(h, w, precision=jax.lax.Precision.HIGHEST) + b


if __name__ == "__main__":
    layers = [1, 64, 64, 64, 64, 64, 3]
    k1_layers = [1, 64, 64, 64, 64, 64, 1]
    k2_layers = [1, 64, 64, 64, 64, 64, 1]
    k3_layers = [1, 64, 64, 64, 64, 64, 1]

    key = jax.random.PRNGKey(0)
    kt, kn, kk1, kk2, kk3 = jax.random.split(key, 5)

    N = 50  # matches ntotal time points in the ROBER setup
    t = jax.random.uniform(kt, (N, 1), jnp.float32, 0.0, 1.0)

    net_params = init_mlp(kn, layers)
    k1_params = init_mlp(kk1, k1_layers)
    k2_params = init_mlp(kk2, k2_layers)
    k3_params = init_mlp(kk3, k3_layers)

    # Pack ONCE (hoisted out of the forward pass; reuse for every call).
    packed = pack_params([net_params, k1_params, k2_params, k3_params])
    packed = jax.block_until_ready(packed)

    # Pure-JAX f32 reference (erf-GELU, matches PyTorch semantics).
    y_ref = mlp_ref(t, net_params)
    refs = (y_ref[:, 0:1], y_ref[:, 1:2], y_ref[:, 2:3],
            mlp_ref(t, k1_params), mlp_ref(t, k2_params), mlp_ref(t, k3_params))

    # Run once at the default tile, and once with a tiny tile to exercise the
    # multi-block (padded, grid>1) pipelined path.
    for tile in (1024, 16):
        outs = pitlnn_forward(t, packed, tile_n=tile)
        outs = jax.block_until_ready(outs)
        for got, ref in zip(outs, refs):
            assert got.shape == ref.shape, (got.shape, ref.shape)
            np.testing.assert_allclose(np.asarray(got), np.asarray(ref),
                                       atol=1e-2, rtol=1e-2)

    print("KERNEL_OK")
</pallas_src>

<mosaic_0001>
module attributes {stable_mosaic.version = 11 : i64} {
  func.func @_fused_mlp_kernel(%arg0: i32, %arg1: memref<56x1xf32, #tpu.memory_space<vmem>>, %arg2: memref<1x256xf32, #tpu.memory_space<vmem>>, %arg3: memref<1x256xf32, #tpu.memory_space<vmem>>, %arg4: memref<256x256xbf16, #tpu.memory_space<vmem>>, %arg5: memref<1x256xf32, #tpu.memory_space<vmem>>, %arg6: memref<256x256xbf16, #tpu.memory_space<vmem>>, %arg7: memref<1x256xf32, #tpu.memory_space<vmem>>, %arg8: memref<256x256xbf16, #tpu.memory_space<vmem>>, %arg9: memref<1x256xf32, #tpu.memory_space<vmem>>, %arg10: memref<256x256xbf16, #tpu.memory_space<vmem>>, %arg11: memref<1x256xf32, #tpu.memory_space<vmem>>, %arg12: memref<256x8xbf16, #tpu.memory_space<vmem>>, %arg13: memref<1x8xf32, #tpu.memory_space<vmem>>, %arg14: memref<56x8xf32, #tpu.memory_space<vmem>>) attributes {dimension_semantics = [#tpu.dimension_semantics<parallel>], iteration_bounds = array<i64: 1>, scalar_prefetch = 0 : i64, scratch_operands = 0 : i64, tpu.core_type = #tpu.core_type<tc>, window_params = [{transform_indices = @transform_0, window_bounds = array<i64: 56, 1>}, {pipeline_mode = #tpu.pipeline_mode<synchronous>, transform_indices = @transform_1, window_bounds = array<i64: 1, 256>}, {pipeline_mode = #tpu.pipeline_mode<synchronous>, transform_indices = @transform_2, window_bounds = array<i64: 1, 256>}, {pipeline_mode = #tpu.pipeline_mode<synchronous>, transform_indices = @transform_3, window_bounds = array<i64: 256, 256>}, {pipeline_mode = #tpu.pipeline_mode<synchronous>, transform_indices = @transform_4, window_bounds = array<i64: 1, 256>}, {pipeline_mode = #tpu.pipeline_mode<synchronous>, transform_indices = @transform_5, window_bounds = array<i64: 256, 256>}, {pipeline_mode = #tpu.pipeline_mode<synchronous>, transform_indices = @transform_6, window_bounds = array<i64: 1, 256>}, {pipeline_mode = #tpu.pipeline_mode<synchronous>, transform_indices = @transform_7, window_bounds = array<i64: 256, 256>}, {pipeline_mode = #tpu.pipeline_mode<synchronous>, transform_indices = @transform_8, window_bounds = array<i64: 1, 256>}, {pipeline_mode = #tpu.pipeline_mode<synchronous>, transform_indices = @transform_9, window_bounds = array<i64: 256, 256>}, {pipeline_mode = #tpu.pipeline_mode<synchronous>, transform_indices = @transform_10, window_bounds = array<i64: 1, 256>}, {pipeline_mode = #tpu.pipeline_mode<synchronous>, transform_indices = @transform_11, window_bounds = array<i64: 256, 8>}, {pipeline_mode = #tpu.pipeline_mode<synchronous>, transform_indices = @transform_12, window_bounds = array<i64: 1, 8>}, {transform_indices = @transform_13, window_bounds = array<i64: 56, 8>}]} {
    %c0 = arith.constant 0 : index
    %c0_0 = arith.constant 0 : index
    %0 = vector.load %arg1[%c0, %c0_0] : memref<56x1xf32, #tpu.memory_space<vmem>>, vector<56x1xf32>
    %c0_1 = arith.constant 0 : index
    %c0_2 = arith.constant 0 : index
    %1 = vector.load %arg2[%c0_1, %c0_2] : memref<1x256xf32, #tpu.memory_space<vmem>>, vector<1x256xf32>
    %2 = vector.broadcast %0 : vector<56x1xf32> to vector<56x256xf32>
    %3 = vector.broadcast %1 : vector<1x256xf32> to vector<56x256xf32>
    %4 = arith.mulf %2, %3 : vector<56x256xf32>
    %c0_3 = arith.constant 0 : index
    %c0_4 = arith.constant 0 : index
    %5 = vector.load %arg3[%c0_3, %c0_4] : memref<1x256xf32, #tpu.memory_space<vmem>>, vector<1x256xf32>
    %6 = vector.broadcast %5 : vector<1x256xf32> to vector<56x256xf32>
    %7 = arith.addf %4, %6 : vector<56x256xf32>
    %cst = arith.constant 5.000000e-01 : f32
    %8 = vector.broadcast %cst : f32 to vector<56x256xf32>
    %9 = arith.mulf %8, %7 : vector<56x256xf32>
    %cst_5 = arith.constant 0.707106769 : f32
    %10 = vector.broadcast %cst_5 : f32 to vector<56x256xf32>
    %11 = arith.mulf %7, %10 : vector<56x256xf32>
    %12 = math.erf %11 : vector<56x256xf32>
    %cst_6 = arith.constant 1.000000e+00 : f32
    %13 = vector.broadcast %cst_6 : f32 to vector<56x256xf32>
    %14 = arith.addf %13, %12 : vector<56x256xf32>
    %15 = arith.mulf %9, %14 : vector<56x256xf32>
    %16 = arith.truncf %15 : vector<56x256xf32> to vector<56x256xbf16>
    %c0_7 = arith.constant 0 : index
    %c0_8 = arith.constant 0 : index
    %17 = vector.load %arg4[%c0_7, %c0_8] : memref<256x256xbf16, #tpu.memory_space<vmem>>, vector<256x256xbf16>
    %cst_9 = arith.constant dense<0.000000e+00> : vector<56x256xf32>
    %18 = tpu.matmul %16, %17, %cst_9 {dimension_numbers = #tpu.dot_dimension_numbers<[1], [0], [0], [1], [0, 0, 1, 1], [], []>} : vector<56x256xbf16>, vector<256x256xbf16>, vector<56x256xf32> -> vector<56x256xf32>
    %c0_10 = arith.constant 0 : index
    %c0_11 = arith.constant 0 : index
    %19 = vector.load %arg5[%c0_10, %c0_11] : memref<1x256xf32, #tpu.memory_space<vmem>>, vector<1x256xf32>
    %20 = vector.broadcast %19 : vector<1x256xf32> to vector<56x256xf32>
    %21 = arith.addf %18, %20 : vector<56x256xf32>
    %cst_12 = arith.constant 5.000000e-01 : f32
    %22 = vector.broadcast %cst_12 : f32 to vector<56x256xf32>
    %23 = arith.mulf %22, %21 : vector<56x256xf32>
    %cst_13 = arith.constant 0.707106769 : f32
    %24 = vector.broadcast %cst_13 : f32 to vector<56x256xf32>
    %25 = arith.mulf %21, %24 : vector<56x256xf32>
    %26 = math.erf %25 : vector<56x256xf32>
    %cst_14 = arith.constant 1.000000e+00 : f32
    %27 = vector.broadcast %cst_14 : f32 to vector<56x256xf32>
    %28 = arith.addf %27, %26 : vector<56x256xf32>
    %29 = arith.mulf %23, %28 : vector<56x256xf32>
    %30 = arith.truncf %29 : vector<56x256xf32> to vector<56x256xbf16>
    %c0_15 = arith.constant 0 : index
    %c0_16 = arith.constant 0 : index
    %31 = vector.load %arg6[%c0_15, %c0_16] : memref<256x256xbf16, #tpu.memory_space<vmem>>, vector<256x256xbf16>
    %cst_17 = arith.constant dense<0.000000e+00> : vector<56x256xf32>
    %32 = tpu.matmul %30, %31, %cst_17 {dimension_numbers = #tpu.dot_dimension_numbers<[1], [0], [0], [1], [0, 0, 1, 1], [], []>} : vector<56x256xbf16>, vector<256x256xbf16>, vector<56x256xf32> -> vector<56x256xf32>
    %c0_18 = arith.constant 0 : index
    %c0_19 = arith.constant 0 : index
    %33 = vector.load %arg7[%c0_18, %c0_19] : memref<1x256xf32, #tpu.memory_space<vmem>>, vector<1x256xf32>
    %34 = vector.broadcast %33 : vector<1x256xf32> to vector<56x256xf32>
    %35 = arith.addf %32, %34 : vector<56x256xf32>
    %cst_20 = arith.constant 5.000000e-01 : f32
    %36 = vector.broadcast %cst_20 : f32 to vector<56x256xf32>
    %37 = arith.mulf %36, %35 : vector<56x256xf32>
    %cst_21 = arith.constant 0.707106769 : f32
    %38 = vector.broadcast %cst_21 : f32 to vector<56x256xf32>
    %39 = arith.mulf %35, %38 : vector<56x256xf32>
    %40 = math.erf %39 : vector<56x256xf32>
    %cst_22 = arith.constant 1.000000e+00 : f32
    %41 = vector.broadcast %cst_22 : f32 to vector<56x256xf32>
    %42 = arith.addf %41, %40 : vector<56x256xf32>
    %43 = arith.mulf %37, %42 : vector<56x256xf32>
    %44 = arith.truncf %43 : vector<56x256xf32> to vector<56x256xbf16>
    %c0_23 = arith.constant 0 : index
    %c0_24 = arith.constant 0 : index
    %45 = vector.load %arg8[%c0_23, %c0_24] : memref<256x256xbf16, #tpu.memory_space<vmem>>, vector<256x256xbf16>
    %cst_25 = arith.constant dense<0.000000e+00> : vector<56x256xf32>
    %46 = tpu.matmul %44, %45, %cst_25 {dimension_numbers = #tpu.dot_dimension_numbers<[1], [0], [0], [1], [0, 0, 1, 1], [], []>} : vector<56x256xbf16>, vector<256x256xbf16>, vector<56x256xf32> -> vector<56x256xf32>
    %c0_26 = arith.constant 0 : index
    %c0_27 = arith.constant 0 : index
    %47 = vector.load %arg9[%c0_26, %c0_27] : memref<1x256xf32, #tpu.memory_space<vmem>>, vector<1x256xf32>
    %48 = vector.broadcast %47 : vector<1x256xf32> to vector<56x256xf32>
    %49 = arith.addf %46, %48 : vector<56x256xf32>
    %cst_28 = arith.constant 5.000000e-01 : f32
    %50 = vector.broadcast %cst_28 : f32 to vector<56x256xf32>
    %51 = arith.mulf %50, %49 : vector<56x256xf32>
    %cst_29 = arith.constant 0.707106769 : f32
    %52 = vector.broadcast %cst_29 : f32 to vector<56x256xf32>
    %53 = arith.mulf %49, %52 : vector<56x256xf32>
    %54 = math.erf %53 : vector<56x256xf32>
    %cst_30 = arith.constant 1.000000e+00 : f32
    %55 = vector.broadcast %cst_30 : f32 to vector<56x256xf32>
    %56 = arith.addf %55, %54 : vector<56x256xf32>
    %57 = arith.mulf %51, %56 : vector<56x256xf32>
    %58 = arith.truncf %57 : vector<56x256xf32> to vector<56x256xbf16>
    %c0_31 = arith.constant 0 : index
    %c0_32 = arith.constant 0 : index
    %59 = vector.load %arg10[%c0_31, %c0_32] : memref<256x256xbf16, #tpu.memory_space<vmem>>, vector<256x256xbf16>
    %cst_33 = arith.constant dense<0.000000e+00> : vector<56x256xf32>
    %60 = tpu.matmul %58, %59, %cst_33 {dimension_numbers = #tpu.dot_dimension_numbers<[1], [0], [0], [1], [0, 0, 1, 1], [], []>} : vector<56x256xbf16>, vector<256x256xbf16>, vector<56x256xf32> -> vector<56x256xf32>
    %c0_34 = arith.constant 0 : index
    %c0_35 = arith.constant 0 : index
    %61 = vector.load %arg11[%c0_34, %c0_35] : memref<1x256xf32, #tpu.memory_space<vmem>>, vector<1x256xf32>
    %62 = vector.broadcast %61 : vector<1x256xf32> to vector<56x256xf32>
    %63 = arith.addf %60, %62 : vector<56x256xf32>
    %cst_36 = arith.constant 5.000000e-01 : f32
    %64 = vector.broadcast %cst_36 : f32 to vector<56x256xf32>
    %65 = arith.mulf %64, %63 : vector<56x256xf32>
    %cst_37 = arith.constant 0.707106769 : f32
    %66 = vector.broadcast %cst_37 : f32 to vector<56x256xf32>
    %67 = arith.mulf %63, %66 : vector<56x256xf32>
    %68 = math.erf %67 : vector<56x256xf32>
    %cst_38 = arith.constant 1.000000e+00 : f32
    %69 = vector.broadcast %cst_38 : f32 to vector<56x256xf32>
    %70 = arith.addf %69, %68 : vector<56x256xf32>
    %71 = arith.mulf %65, %70 : vector<56x256xf32>
    %72 = arith.truncf %71 : vector<56x256xf32> to vector<56x256xbf16>
    %c0_39 = arith.constant 0 : index
    %c0_40 = arith.constant 0 : index
    %73 = vector.load %arg12[%c0_39, %c0_40] : memref<256x8xbf16, #tpu.memory_space<vmem>>, vector<256x8xbf16>
    %cst_41 = arith.constant dense<0.000000e+00> : vector<56x8xf32>
    %74 = tpu.matmul %72, %73, %cst_41 {dimension_numbers = #tpu.dot_dimension_numbers<[1], [0], [0], [1], [0, 0, 1, 1], [], []>} : vector<56x256xbf16>, vector<256x8xbf16>, vector<56x8xf32> -> vector<56x8xf32>
    %c0_42 = arith.constant 0 : index
    %c0_43 = arith.constant 0 : index
    %75 = vector.load %arg13[%c0_42, %c0_43] : memref<1x8xf32, #tpu.memory_space<vmem>>, vector<1x8xf32>
    %76 = vector.broadcast %75 : vector<1x8xf32> to vector<56x8xf32>
    %77 = arith.addf %74, %76 : vector<56x8xf32>
    %c0_44 = arith.constant 0 : index
    %c0_45 = arith.constant 0 : index
    %78 = vector.load %arg14[%c0_44, %c0_45] : memref<56x8xf32, #tpu.memory_space<vmem>>, vector<56x8xf32>
    tpu.vector_store %arg14[%c0_44, %c0_45], %77 {strides = array<i32>} : memref<56x8xf32, #tpu.memory_space<vmem>>, vector<56x8xf32>,
    return
  }
  func.func @transform_0(%arg0: i32) -> (i32, i32) {
    %c0_i32 = arith.constant 0 : i32
    %c0_i32_0 = arith.constant 0 : i32
    return %arg0, %c0_i32 : i32, i32
  }
  func.func @transform_1(%arg0: i32) -> (i32, i32) {
    %c0_i32 = arith.constant 0 : i32
    %c0_i32_0 = arith.constant 0 : i32
    %c0_i32_1 = arith.constant 0 : i32
    return %c0_i32, %c0_i32_0 : i32, i32
  }
  func.func @transform_2(%arg0: i32) -> (i32, i32) {
    %c0_i32 = arith.constant 0 : i32
    %c0_i32_0 = arith.constant 0 : i32
    %c0_i32_1 = arith.constant 0 : i32
    return %c0_i32, %c0_i32_0 : i32, i32
  }
  func.func @transform_3(%arg0: i32) -> (i32, i32) {
    %c0_i32 = arith.constant 0 : i32
    %c0_i32_0 = arith.constant 0 : i32
    %c0_i32_1 = arith.constant 0 : i32
    return %c0_i32, %c0_i32_0 : i32, i32
  }
  func.func @transform_4(%arg0: i32) -> (i32, i32) {
    %c0_i32 = arith.constant 0 : i32
    %c0_i32_0 = arith.constant 0 : i32
    %c0_i32_1 = arith.constant 0 : i32
    return %c0_i32, %c0_i32_0 : i32, i32
  }
  func.func @transform_5(%arg0: i32) -> (i32, i32) {
    %c0_i32 = arith.constant 0 : i32
    %c0_i32_0 = arith.constant 0 : i32
    %c0_i32_1 = arith.constant 0 : i32
    return %c0_i32, %c0_i32_0 : i32, i32
  }
  func.func @transform_6(%arg0: i32) -> (i32, i32) {
    %c0_i32 = arith.constant 0 : i32
    %c0_i32_0 = arith.constant 0 : i32
    %c0_i32_1 = arith.constant 0 : i32
    return %c0_i32, %c0_i32_0 : i32, i32
  }
  func.func @transform_7(%arg0: i32) -> (i32, i32) {
    %c0_i32 = arith.constant 0 : i32
    %c0_i32_0 = arith.constant 0 : i32
    %c0_i32_1 = arith.constant 0 : i32
    return %c0_i32, %c0_i32_0 : i32, i32
  }
  func.func @transform_8(%arg0: i32) -> (i32, i32) {
    %c0_i32 = arith.constant 0 : i32
    %c0_i32_0 = arith.constant 0 : i32
    %c0_i32_1 = arith.constant 0 : i32
    return %c0_i32, %c0_i32_0 : i32, i32
  }
  func.func @transform_9(%arg0: i32) -> (i32, i32) {
    %c0_i32 = arith.constant 0 : i32
    %c0_i32_0 = arith.constant 0 : i32
    %c0_i32_1 = arith.constant 0 : i32
    return %c0_i32, %c0_i32_0 : i32, i32
  }
  func.func @transform_10(%arg0: i32) -> (i32, i32) {
    %c0_i32 = arith.constant 0 : i32
    %c0_i32_0 = arith.constant 0 : i32
    %c0_i32_1 = arith.constant 0 : i32
    return %c0_i32, %c0_i32_0 : i32, i32
  }
  func.func @transform_11(%arg0: i32) -> (i32, i32) {
    %c0_i32 = arith.constant 0 : i32
    %c0_i32_0 = arith.constant 0 : i32
    %c0_i32_1 = arith.constant 0 : i32
    return %c0_i32, %c0_i32_0 : i32, i32
  }
  func.func @transform_12(%arg0: i32) -> (i32, i32) {
    %c0_i32 = arith.constant 0 : i32
    %c0_i32_0 = arith.constant 0 : i32
    %c0_i32_1 = arith.constant 0 : i32
    return %c0_i32, %c0_i32_0 : i32, i32
  }
  func.func @transform_13(%arg0: i32) -> (i32, i32) {
    %c0_i32 = arith.constant 0 : i32
    %c0_i32_0 = arith.constant 0 : i32
    return %arg0, %c0_i32 : i32, i32
  }
}

</mosaic_0001>

<llo_original>
// kernel: tpu_custom_call.1
$region0: #{tpu_custom_call.1}
  #allocation0 [shape = 'u32[]', space=smem, size = 0x4, offset = 0x4, fixed_abs, tag = 'smem constant byte address 0x4 - core index']
  #allocation1 [shape = 'u32[144,128]{1,0:T(1,128)}', space=vmem, size = 0x12000, scoped, tag = 'internal scratch']
  %s0 = inlined_call_operand.vmem [shape: f32[56,1], index: 0, kind: input, shape index: {}]
  %s1 = inlined_call_operand.vmem [shape: f32[1,256], index: 1, kind: input, shape index: {}]
  %s2 = inlined_call_operand.vmem [shape: f32[1,256], index: 2, kind: input, shape index: {}]
  %s3 = inlined_call_operand.hbm [shape: bf16[256,256], index: 3, kind: input, shape index: {}]
  %s4 = inlined_call_operand.vmem [shape: f32[1,256], index: 4, kind: input, shape index: {}]
  %s5 = inlined_call_operand.hbm [shape: bf16[256,256], index: 5, kind: input, shape index: {}]
  %s6 = inlined_call_operand.vmem [shape: f32[1,256], index: 6, kind: input, shape index: {}]
  %s7 = inlined_call_operand.hbm [shape: bf16[256,256], index: 7, kind: input, shape index: {}]
  %s8 = inlined_call_operand.vmem [shape: f32[1,256], index: 8, kind: input, shape index: {}]
  %s9 = inlined_call_operand.hbm [shape: bf16[256,256], index: 9, kind: input, shape index: {}]
  %s10 = inlined_call_operand.vmem [shape: f32[1,256], index: 10, kind: input, shape index: {}]
  %s11 = inlined_call_operand.vmem [shape: bf16[256,8], index: 11, kind: input, shape index: {}]
  %s12 = inlined_call_operand.vmem [shape: f32[1,8], index: 12, kind: input, shape index: {}]
  %s13 = inlined_call_operand.vmem [shape: f32[56,8], index: 13, kind: output, shape index: {}]
  %s14 = sld [smem:[#allocation0]]
  $region78: #{tpu_custom_call.1} parent=0
    _
  %s16 = ssub.s32 1, %s14
  %s17 = scalar_select 0, %s16, %s14
  $region1: #{tpu_custom_call.1} parent=0
    #allocation2 [shape = 'u8[131072]{0}', space=vmem, size = 0x20000, scoped, tag = 'input window, operand 3, single buffered']
    #allocation3 [shape = 's32[1]{0}', space=sflag, size = 0x4, scoped, tag = 'scoped memory for tpu_custom_call.1']
    #allocation4 [shape = 'u8[131072]{0}', space=vmem, size = 0x20000, scoped, tag = 'input window, operand 5, single buffered']
    #allocation5 [shape = 's32[1]{0}', space=sflag, size = 0x4, scoped, tag = 'scoped memory for tpu_custom_call.1']
    #allocation6 [shape = 'u8[131072]{0}', space=vmem, size = 0x20000, scoped, tag = 'input window, operand 7, single buffered']
    #allocation7 [shape = 'u8[131072]{0}', space=vmem, size = 0x20000, scoped, tag = 'input window, operand 9, single buffered']
    #allocation8 [shape = 's32[1]{0}', space=sflag, size = 0x4, scoped, tag = 'scoped memory for tpu_custom_call.1']
    %18 = vsyncpa [#allocation3], 0
    %19 = vsyncpa [#allocation5], 0
    %20 = vsyncpa [#allocation8], 0
    // Predicated region
    $region2: #{tpu_custom_call.1} parent=1 // pred_check
      _
    $region3: #{tpu_custom_call.1} parent=1 // pred_check_branch
      %22 = sbr.rel (0) target = $region5
    $region4: #{tpu_custom_call.1} parent=1 // pred_region
      _
    $region5: #{tpu_custom_call.1} parent=1 // pred_fallthru
      _
    // Predicated region
    $region6: #{tpu_custom_call.1} parent=1 // pred_check
      _
    $region7: #{tpu_custom_call.1} parent=1 // pred_check_branch
      %24 = sbr.rel (0) target = $region9
    $region8: #{tpu_custom_call.1} parent=1 // pred_region
      _
    $region9: #{tpu_custom_call.1} parent=1 // pred_fallthru
      _
    // Predicated region
    $region10: #{tpu_custom_call.1} parent=1 // pred_check
      _
    $region11: #{tpu_custom_call.1} parent=1 // pred_check_branch
      %26 = sbr.rel (0) target = $region13
    $region12: #{tpu_custom_call.1} parent=1 // pred_region
      _
    $region13: #{tpu_custom_call.1} parent=1 // pred_fallthru
      _
    // Predicated region
    $region14: #{tpu_custom_call.1} parent=1 // pred_check
      _
    $region15: #{tpu_custom_call.1} parent=1 // pred_check_branch
      %28 = sbr.rel (0) target = $region17
    $region16: #{tpu_custom_call.1} parent=1 // pred_region
      %s30 = ssub.s32 4096, 4096
      %31 = vsyncadd [#allocation3], %s30
      %s32 = sshll.u32 [#allocation2], 4
      %s33 = int_to_ptr.vmem [resolvable:$true] %s32
      %38 = dma.hbm_to_vmem [thread:$0]  %s3, 4096, %s33, [#allocation3], 128, 128, 8
    $region17: #{tpu_custom_call.1} parent=1 // pred_fallthru
      _
    // Predicated region
    $region18: #{tpu_custom_call.1} parent=1 // pred_check
      _
    $region19: #{tpu_custom_call.1} parent=1 // pred_check_branch
      %40 = sbr.rel (0) target = $region21
    $region20: #{tpu_custom_call.1} parent=1 // pred_region
      _
    $region21: #{tpu_custom_call.1} parent=1 // pred_fallthru
      _
    // Predicated region
    $region22: #{tpu_custom_call.1} parent=1 // pred_check
      _
    $region23: #{tpu_custom_call.1} parent=1 // pred_check_branch
      %42 = sbr.rel (0) target = $region25
    $region24: #{tpu_custom_call.1} parent=1 // pred_region
      %s44 = ssub.s32 4096, 4096
      %45 = vsyncadd [#allocation5], %s44
      %s46 = sshll.u32 [#allocation4], 4
      %s47 = int_to_ptr.vmem [resolvable:$true] %s46
      %52 = dma.hbm_to_vmem [thread:$0]  %s5, 4096, %s47, [#allocation5], 128, 128, 8
    $region25: #{tpu_custom_call.1} parent=1 // pred_fallthru
      _
    // Predicated region
    $region26: #{tpu_custom_call.1} parent=1 // pred_check
      _
    $region27: #{tpu_custom_call.1} parent=1 // pred_check_branch
      %54 = sbr.rel (0) target = $region29
    $region28: #{tpu_custom_call.1} parent=1 // pred_region
      _
    $region29: #{tpu_custom_call.1} parent=1 // pred_fallthru
      _
    // Predicated region
    $region30: #{tpu_custom_call.1} parent=1 // pred_check
      _
    $region31: #{tpu_custom_call.1} parent=1 // pred_check_branch
      %56 = sbr.rel (0) target = $region33
    $region32: #{tpu_custom_call.1} parent=1 // pred_region
      %s58 = ssub.s32 4096, 4096
      %59 = vsyncadd [#allocation5], %s58
      %s60 = sshll.u32 [#allocation6], 4
      %s61 = int_to_ptr.vmem [resolvable:$true] %s60
      %66 = dma.hbm_to_vmem [thread:$0]  %s7, 4096, %s61, [#allocation5], 128, 128, 8
    $region33: #{tpu_custom_call.1} parent=1 // pred_fallthru
      _
    // Predicated region
    $region34: #{tpu_custom_call.1} parent=1 // pred_check
      _
    $region35: #{tpu_custom_call.1} parent=1 // pred_check_branch
      %68 = sbr.rel (0) target = $region37
    $region36: #{tpu_custom_call.1} parent=1 // pred_region
      _
    $region37: #{tpu_custom_call.1} parent=1 // pred_fallthru
      _
    // Predicated region
    $region38: #{tpu_custom_call.1} parent=1 // pred_check
      _
    $region39: #{tpu_custom_call.1} parent=1 // pred_check_branch
      %70 = sbr.rel (0) target = $region41
    $region40: #{tpu_custom_call.1} parent=1 // pred_region
      %s72 = ssub.s32 4096, 4096
      %73 = vsyncadd [#allocation8], %s72
      %s74 = sshll.u32 [#allocation7], 4
      %s75 = int_to_ptr.vmem [resolvable:$true] %s74
      %80 = dma.hbm_to_vmem [thread:$0]  %s9, 4096, %s75, [#allocation8], 128, 128, 8
    $region41: #{tpu_custom_call.1} parent=1 // pred_fallthru
      _
    // Predicated region
    $region42: #{tpu_custom_call.1} parent=1 // pred_check
      _
    $region43: #{tpu_custom_call.1} parent=1 // pred_check_branch
      %82 = sbr.rel (0) target = $region45
    $region44: #{tpu_custom_call.1} parent=1 // pred_region
      _
    $region45: #{tpu_custom_call.1} parent=1 // pred_fallthru
      _
    // Predicated region
    $region46: #{tpu_custom_call.1} parent=1 // pred_check
      _
    $region47: #{tpu_custom_call.1} parent=1 // pred_check_branch
      %84 = sbr.rel (0) target = $region49
    $region48: #{tpu_custom_call.1} parent=1 // pred_region
      _
    $region49: #{tpu_custom_call.1} parent=1 // pred_fallthru
      _
    // Predicated region
    $region50: #{tpu_custom_call.1} parent=1 // pred_check
      _
    $region51: #{tpu_custom_call.1} parent=1 // pred_check_branch
      %86 = sbr.rel (0) target = $region53
    $region52: #{tpu_custom_call.1} parent=1 // pred_region
      _
    $region53: #{tpu_custom_call.1} parent=1 // pred_fallthru
      _
    // Predicated region
    $region54: #{tpu_custom_call.1} parent=1 // pred_check
      _
    $region55: #{tpu_custom_call.1} parent=1 // pred_check_branch
      %88 = sbr.rel (0) target = $region57
    $region56: #{tpu_custom_call.1} parent=1 // pred_region
      %89 = dma.done [#allocation3], 4096
    $region57: #{tpu_custom_call.1} parent=1 // pred_fallthru
      _
    // Predicated region
    $region58: #{tpu_custom_call.1} parent=1 // pred_check
      _
    $region59: #{tpu_custom_call.1} parent=1 // pred_check_branch
      %91 = sbr.rel (0) target = $region61
    $region60: #{tpu_custom_call.1} parent=1 // pred_region
      %92 = dma.done [#allocation5], 4096
    $region61: #{tpu_custom_call.1} parent=1 // pred_fallthru
      _
    // Predicated region
    $region62: #{tpu_custom_call.1} parent=1 // pred_check
      _
    $region63: #{tpu_custom_call.1} parent=1 // pred_check_branch
      %94 = sbr.rel (0) target = $region65
    $region64: #{tpu_custom_call.1} parent=1 // pred_region
      %95 = dma.done [#allocation5], 4096
    $region65: #{tpu_custom_call.1} parent=1 // pred_fallthru
      _
    // Predicated region
    $region66: #{tpu_custom_call.1} parent=1 // pred_check
      _
    $region67: #{tpu_custom_call.1} parent=1 // pred_check_branch
      %97 = sbr.rel (0) target = $region69
    $region68: #{tpu_custom_call.1} parent=1 // pred_region
      %98 = dma.done [#allocation8], 4096
    $region69: #{tpu_custom_call.1} parent=1 // pred_fallthru
      _
    %v100 = vld [vmem:[%s0] sm:$0xff]
    %v101 = vld [vmem:[%s0 + $0x8] sm:$0xff]
    %v102 = vld [vmem:[%s0 + $0x10] sm:$0xff]
    %v103 = vld [vmem:[%s0 + $0x18] sm:$0xff]
    %v104 = vld [vmem:[%s0 + $0x20] sm:$0xff]
    %v105 = vld [vmem:[%s0 + $0x28] sm:$0xff]
    %v106 = vld [vmem:[%s0 + $0x30] sm:$0xff]
    %v107 = vld [vmem:[%s1] sm:$0x3]
    %109 = vset.pattern.permute.xlu0 0
    %110 = vperm.xlu0 %109, %v100
    %v111 = vpop.permute.xlu0 %110
    %114 = vset.pattern.permute.xlu0 0
    %115 = vperm.xlu0 %114, %v101
    %v116 = vpop.permute.xlu0 %115
    %119 = vset.pattern.permute.xlu0 0
    %120 = vperm.xlu0 %119, %v102
    %v121 = vpop.permute.xlu0 %120
    %124 = vset.pattern.permute.xlu0 0
    %125 = vperm.xlu0 %124, %v103
    %v126 = vpop.permute.xlu0 %125
    %129 = vset.pattern.permute.xlu0 0
    %130 = vperm.xlu0 %129, %v104
    %v131 = vpop.permute.xlu0 %130
    %134 = vset.pattern.permute.xlu0 0
    %135 = vperm.xlu0 %134, %v105
    %v136 = vpop.permute.xlu0 %135
    %139 = vset.pattern.permute.xlu0 0
    %140 = vperm.xlu0 %139, %v106
    %v141 = vpop.permute.xlu0 %140
    %v144 = vlaneseq
    %v145 = vshrl.u32 %v144, 7
    %v146 = vsub.s32 0, %v145
    %v147 = vrot.slane %v107, %v146
    %v148 = vlaneseq
    %v149 = vshrl.u32 %v148, 7
    %v150 = vsub.s32 1, %v149
    %v151 = vrot.slane %v107, %v150
    %v154 = vmul.f32 %v111, %v147
    %v155 = vmul.f32 %v111, %v151
    %v156 = vmul.f32 %v116, %v147
    %v157 = vmul.f32 %v116, %v151
    %v158 = vmul.f32 %v121, %v147
    %v159 = vmul.f32 %v121, %v151
    %v160 = vmul.f32 %v126, %v147
    %v161 = vmul.f32 %v126, %v151
    %v162 = vmul.f32 %v131, %v147
    %v163 = vmul.f32 %v131, %v151
    %v164 = vmul.f32 %v136, %v147
    %v165 = vmul.f32 %v136, %v151
    %v166 = vmul.f32 %v141, %v147
    %v167 = vmul.f32 %v141, %v151
    %v168 = vld [vmem:[%s2] sm:$0x3]
    %v170 = vlaneseq
    %v171 = vshrl.u32 %v170, 7
    %v172 = vsub.s32 0, %v171
    %v173 = vrot.slane %v168, %v172
    %v174 = vlaneseq
    %v175 = vshrl.u32 %v174, 7
    %v176 = vsub.s32 1, %v175
    %v177 = vrot.slane %v168, %v176
    %v180 = vadd.f32 %v154, %v173
    %v181 = vadd.f32 %v155, %v177
    %v182 = vadd.f32 %v156, %v173
    %v183 = vadd.f32 %v157, %v177
    %v184 = vadd.f32 %v158, %v173
    %v185 = vadd.f32 %v159, %v177
    %v186 = vadd.f32 %v160, %v173
    %v187 = vadd.f32 %v161, %v177
    %v188 = vadd.f32 %v162, %v173
    %v189 = vadd.f32 %v163, %v177
    %v190 = vadd.f32 %v164, %v173
    %v191 = vadd.f32 %v165, %v177
    %v192 = vadd.f32 %v166, %v173
    %v193 = vadd.f32 %v167, %v177
    %v194 = vmul.f32 %v180, 0.5
    %v195 = vmul.f32 %v181, 0.5
    %v196 = vmul.f32 %v182, 0.5
    %v197 = vmul.f32 %v183, 0.5
    %v198 = vmul.f32 %v184, 0.5
    %v199 = vmul.f32 %v185, 0.5
    %v200 = vmul.f32 %v186, 0.5
    %v201 = vmul.f32 %v187, 0.5
    %v202 = vmul.f32 %v188, 0.5
    %v203 = vmul.f32 %v189, 0.5
    %v204 = vmul.f32 %v190, 0.5
    %v205 = vmul.f32 %v191, 0.5
    %v206 = vmul.f32 %v192, 0.5
    %v207 = vmul.f32 %v193, 0.5
    %v208 = vmul.f32 %v180, 0.70710677
    %v209 = vmul.f32 %v181, 0.70710677
    %v210 = vmul.f32 %v182, 0.70710677
    %v211 = vmul.f32 %v183, 0.70710677
    %v212 = vmul.f32 %v184, 0.70710677
    %v213 = vmul.f32 %v185, 0.70710677
    %v214 = vmul.f32 %v186, 0.70710677
    %v215 = vmul.f32 %v187, 0.70710677
    %v216 = vmul.f32 %v188, 0.70710677
    %v217 = vmul.f32 %v189, 0.70710677
    %v218 = vmul.f32 %v190, 0.70710677
    %v219 = vmul.f32 %v191, 0.70710677
    %v220 = vmul.f32 %v192, 0.70710677
    %v221 = vmul.f32 %v193, 0.70710677
    %v222 = verf.f32.pop %v208
    %v223 = verf.f32.pop %v209
    %v224 = verf.f32.pop %v210
    %v225 = verf.f32.pop %v211
    %v226 = verf.f32.pop %v212
    %v227 = verf.f32.pop %v213
    %v228 = verf.f32.pop %v214
    %v229 = verf.f32.pop %v215
    %v230 = verf.f32.pop %v216
    %v231 = verf.f32.pop %v217
    %v232 = verf.f32.pop %v218
    %v233 = verf.f32.pop %v219
    %v234 = verf.f32.pop %v220
    %v235 = verf.f32.pop %v221
    %v236 = vadd.f32 %v222, 1.0
    %v237 = vadd.f32 %v223, 1.0
    %v238 = vadd.f32 %v224, 1.0
    %v239 = vadd.f32 %v225, 1.0
    %v240 = vadd.f32 %v226, 1.0
    %v241 = vadd.f32 %v227, 1.0
    %v242 = vadd.f32 %v228, 1.0
    %v243 = vadd.f32 %v229, 1.0
    %v244 = vadd.f32 %v230, 1.0
    %v245 = vadd.f32 %v231, 1.0
    %v246 = vadd.f32 %v232, 1.0
    %v247 = vadd.f32 %v233, 1.0
    %v248 = vadd.f32 %v234, 1.0
    %v249 = vadd.f32 %v235, 1.0
    %v250 = vmul.f32 %v194, %v236
    %v251 = vmul.f32 %v195, %v237
    %v252 = vmul.f32 %v196, %v238
    %v253 = vmul.f32 %v197, %v239
    %v254 = vmul.f32 %v198, %v240
    %v255 = vmul.f32 %v199, %v241
    %v256 = vmul.f32 %v200, %v242
    %v257 = vmul.f32 %v201, %v243
    %v258 = vmul.f32 %v202, %v244
    %v259 = vmul.f32 %v203, %v245
    %v260 = vmul.f32 %v204, %v246
    %v261 = vmul.f32 %v205, %v247
    %v262 = vmul.f32 %v206, %v248
    %v263 = vmul.f32 %v207, %v249
    %v264 = vpack.c.bf16 %v252, %v250
    %v265 = vpack.c.bf16 %v253, %v251
    %v266 = vpack.c.bf16 %v256, %v254
    %v267 = vpack.c.bf16 %v257, %v255
    %v268 = vpack.c.bf16 %v260, %v258
    %v269 = vpack.c.bf16 %v261, %v259
    %v270 = vpack.c.bf16 %v262, %v262
    %v271 = vpack.c.bf16 %v263, %v263
    %v272 = vld [vmem:[#allocation2] sm:$0xff]
    %v273 = vld [vmem:[#allocation2 + $0x8] sm:$0xff]
    %v274 = vld [vmem:[#allocation2 + $0x10] sm:$0xff]
    %v275 = vld [vmem:[#allocation2 + $0x18] sm:$0xff]
    %v276 = vld [vmem:[#allocation2 + $0x20] sm:$0xff]
    %v277 = vld [vmem:[#allocation2 + $0x28] sm:$0xff]
    %v278 = vld [vmem:[#allocation2 + $0x30] sm:$0xff]
    %v279 = vld [vmem:[#allocation2 + $0x38] sm:$0xff]
    %v280 = vld [vmem:[#allocation2 + $0x40] sm:$0xff]
    %v281 = vld [vmem:[#allocation2 + $0x48] sm:$0xff]
    %v282 = vld [vmem:[#allocation2 + $0x50] sm:$0xff]
    %v283 = vld [vmem:[#allocation2 + $0x58] sm:$0xff]
    %v284 = vld [vmem:[#allocation2 + $0x60] sm:$0xff]
    %v285 = vld [vmem:[#allocation2 + $0x68] sm:$0xff]
    %v286 = vld [vmem:[#allocation2 + $0x70] sm:$0xff]
    %v287 = vld [vmem:[#allocation2 + $0x78] sm:$0xff]
    %v288 = vld [vmem:[#allocation2 + $0x80] sm:$0xff]
    %v289 = vld [vmem:[#allocation2 + $0x88] sm:$0xff]
    %v290 = vld [vmem:[#allocation2 + $0x90] sm:$0xff]
    %v291 = vld [vmem:[#allocation2 + $0x98] sm:$0xff]
    %v292 = vld [vmem:[#allocation2 + $0xa0] sm:$0xff]
    %v293 = vld [vmem:[#allocation2 + $0xa8] sm:$0xff]
    %v294 = vld [vmem:[#allocation2 + $0xb0] sm:$0xff]
    %v295 = vld [vmem:[#allocation2 + $0xb8] sm:$0xff]
    %v296 = vld [vmem:[#allocation2 + $0xc0] sm:$0xff]
    %v297 = vld [vmem:[#allocation2 + $0xc8] sm:$0xff]
    %v298 = vld [vmem:[#allocation2 + $0xd0] sm:$0xff]
    %v299 = vld [vmem:[#allocation2 + $0xd8] sm:$0xff]
    %v300 = vld [vmem:[#allocation2 + $0xe0] sm:$0xff]
    %v301 = vld [vmem:[#allocation2 + $0xe8] sm:$0xff]
    %v302 = vld [vmem:[#allocation2 + $0xf0] sm:$0xff]
    %v303 = vld [vmem:[#allocation2 + $0xf8] sm:$0xff]
    %v304 = vld [vmem:[%s4] sm:$0x3]
    %v306 = vlaneseq
    %v307 = vshrl.u32 %v306, 7
    %v308 = vsub.s32 0, %v307
    %v309 = vrot.slane %v304, %v308
    %v310 = vlaneseq
    %v311 = vshrl.u32 %v310, 7
    %v312 = vsub.s32 1, %v311
    %v313 = vrot.slane %v304, %v312
    %v348 = vunpack.c.l.b16 %v272
    %v349 = vunpack.c.h.b16 %v272
    %v350 = vunpack.c.l.b16 %v273
    %v351 = vunpack.c.h.b16 %v273
    %v352 = vunpack.c.l.b16 %v274
    %v353 = vunpack.c.h.b16 %v274
    %v354 = vunpack.c.l.b16 %v275
    %v355 = vunpack.c.h.b16 %v275
    %v356 = vunpack.c.l.b16 %v276
    %v357 = vunpack.c.h.b16 %v276
    %v358 = vunpack.c.l.b16 %v277
    %v359 = vunpack.c.h.b16 %v277
    %v360 = vunpack.c.l.b16 %v278
    %v361 = vunpack.c.h.b16 %v278
    %v362 = vunpack.c.l.b16 %v279
    %v363 = vunpack.c.h.b16 %v279
    %v364 = vunpack.c.l.b16 %v280
    %v365 = vunpack.c.h.b16 %v280
    %v366 = vunpack.c.l.b16 %v281
    %v367 = vunpack.c.h.b16 %v281
    %v368 = vunpack.c.l.b16 %v282
    %v369 = vunpack.c.h.b16 %v282
    %v370 = vunpack.c.l.b16 %v283
    %v371 = vunpack.c.h.b16 %v283
    %v372 = vunpack.c.l.b16 %v284
    %v373 = vunpack.c.h.b16 %v284
    %v374 = vunpack.c.l.b16 %v285
    %v375 = vunpack.c.h.b16 %v285
    %v376 = vunpack.c.l.b16 %v286
    %v377 = vunpack.c.h.b16 %v286
    %v378 = vunpack.c.l.b16 %v287
    %v379 = vunpack.c.h.b16 %v287
    %v380 = vunpack.c.l.b16 %v288
    %v381 = vunpack.c.h.b16 %v288
    %v382 = vunpack.c.l.b16 %v289
    %v383 = vunpack.c.h.b16 %v289
    %v384 = vunpack.c.l.b16 %v290
    %v385 = vunpack.c.h.b16 %v290
    %v386 = vunpack.c.l.b16 %v291
    %v387 = vunpack.c.h.b16 %v291
    %v388 = vunpack.c.l.b16 %v292
    %v389 = vunpack.c.h.b16 %v292
    %v390 = vunpack.c.l.b16 %v293
    %v391 = vunpack.c.h.b16 %v293
    %v392 = vunpack.c.l.b16 %v294
    %v393 = vunpack.c.h.b16 %v294
    %v394 = vunpack.c.l.b16 %v295
    %v395 = vunpack.c.h.b16 %v295
    %v396 = vunpack.c.l.b16 %v296
    %v397 = vunpack.c.h.b16 %v296
    %v398 = vunpack.c.l.b16 %v297
    %v399 = vunpack.c.h.b16 %v297
    %v400 = vunpack.c.l.b16 %v298
    %v401 = vunpack.c.h.b16 %v298
    %v402 = vunpack.c.l.b16 %v299
    %v403 = vunpack.c.h.b16 %v299
    %v404 = vunpack.c.l.b16 %v300
    %v405 = vunpack.c.h.b16 %v300
    %v406 = vunpack.c.l.b16 %v301
    %v407 = vunpack.c.h.b16 %v301
    %v408 = vunpack.c.l.b16 %v302
    %v409 = vunpack.c.h.b16 %v302
    %v410 = vunpack.c.l.b16 %v303
    %v411 = vunpack.c.h.b16 %v303
    %v412 = vpack.c.b16 %v350, %v348
    %v413 = vpack.c.b16 %v351, %v349
    %v414 = vpack.c.b16 %v354, %v352
    %v415 = vpack.c.b16 %v355, %v353
    %v416 = vpack.c.b16 %v358, %v356
    %v417 = vpack.c.b16 %v359, %v357
    %v418 = vpack.c.b16 %v362, %v360
    %v419 = vpack.c.b16 %v363, %v361
    %v420 = vpack.c.b16 %v366, %v364
    %v421 = vpack.c.b16 %v367, %v365
    %v422 = vpack.c.b16 %v370, %v368
    %v423 = vpack.c.b16 %v371, %v369
    %v424 = vpack.c.b16 %v374, %v372
    %v425 = vpack.c.b16 %v375, %v373
    %v426 = vpack.c.b16 %v378, %v376
    %v427 = vpack.c.b16 %v379, %v377
    %v428 = vpack.c.b16 %v382, %v380
    %v429 = vpack.c.b16 %v383, %v381
    %v430 = vpack.c.b16 %v386, %v384
    %v431 = vpack.c.b16 %v387, %v385
    %v432 = vpack.c.b16 %v390, %v388
    %v433 = vpack.c.b16 %v391, %v389
    %v434 = vpack.c.b16 %v394, %v392
    %v435 = vpack.c.b16 %v395, %v393
    %v436 = vpack.c.b16 %v398, %v396
    %v437 = vpack.c.b16 %v399, %v397
    %v438 = vpack.c.b16 %v402, %v400
    %v439 = vpack.c.b16 %v403, %v401
    %v440 = vpack.c.b16 %v406, %v404
    %v441 = vpack.c.b16 %v407, %v405
    %v442 = vpack.c.b16 %v410, %v408
    %v443 = vpack.c.b16 %v411, %v409
    %476 = vmatprep.subr.bf16.mxu0 %v413
    %477 = vmatpush1.bf16.msra.mxu0 %v412
    %478 = vmatprep.subr.bf16.mxu0 %v415
    %479 = vmatpush1.bf16.msra.mxu0 %v414
    %480 = vmatprep.subr.bf16.mxu0 %v417
    %481 = vmatpush1.bf16.msra.mxu0 %v416
    %482 = vmatprep.subr.bf16.mxu0 %v419
    %483 = vmatpush1.bf16.msra.mxu0 %v418
    %484 = vmatprep.subr.bf16.mxu0 %v421
    %485 = vmatpush1.bf16.msra.mxu0 %v420
    %486 = vmatprep.subr.bf16.mxu0 %v423
    %487 = vmatpush1.bf16.msra.mxu0 %v422
    %488 = vmatprep.subr.bf16.mxu0 %v425
    %489 = vmatpush1.bf16.msra.mxu0 %v424
    %490 = vmatprep.subr.bf16.mxu0 %v427
    %491 = vmatpush1.bf16.msra.mxu0 %v426
    %492 = vmatprep.subr.bf16.mxu0 %v429
    %493 = vmatpush1.bf16.msra.mxu0 %v428
    %494 = vmatprep.subr.bf16.mxu0 %v431
    %495 = vmatpush1.bf16.msra.mxu0 %v430
    %496 = vmatprep.subr.bf16.mxu0 %v433
    %497 = vmatpush1.bf16.msra.mxu0 %v432
    %498 = vmatprep.subr.bf16.mxu0 %v435
    %499 = vmatpush1.bf16.msra.mxu0 %v434
    %500 = vmatprep.subr.bf16.mxu0 %v437
    %501 = vmatpush1.bf16.msra.mxu0 %v436
    %502 = vmatprep.subr.bf16.mxu0 %v439
    %503 = vmatpush1.bf16.msra.mxu0 %v438
    %504 = vmatprep.subr.bf16.mxu0 %v441
    %505 = vmatpush1.bf16.msra.mxu0 %v440
    %506 = vmatprep.subr.bf16.mxu0 %v443
    %507 = vmatpush1.bf16.msra.mxu0 %v442
    %508 = vmatprep.mubr.bf16.mxu0 %v265
    %509 = vmatmul.mubr.bf16.gmra.mrb[0].mxu0 %v264
    %v510 = vpop.f32.mrb[0].mxu0
    %v511 = vadd.f32 %v309, %v510
    %v512 = vpop.f32.mrb[0].mxu0
    %v513 = vadd.f32 %v313, %v512
    %v514 = vpop.f32.mrb[0].mxu0
    %v515 = vadd.f32 %v309, %v514
    %v516 = vpop.f32.mrb[0].mxu0
    %v517 = vadd.f32 %v313, %v516
    %518 = vmatprep.mubr.bf16.mxu0 %v267
    %519 = vmatmul.mubr.bf16.gmra.mrb[0].mxu0 %v266
    %v520 = vpop.f32.mrb[0].mxu0
    %v521 = vadd.f32 %v309, %v520
    %v522 = vpop.f32.mrb[0].mxu0
    %v523 = vadd.f32 %v313, %v522
    %v524 = vpop.f32.mrb[0].mxu0
    %v525 = vadd.f32 %v309, %v524
    %v526 = vpop.f32.mrb[0].mxu0
    %v527 = vadd.f32 %v313, %v526
    %528 = vmatprep.mubr.bf16.mxu0 %v269
    %529 = vmatmul.mubr.bf16.gmra.mrb[0].mxu0 %v268
    %v530 = vpop.f32.mrb[0].mxu0
    %v531 = vadd.f32 %v309, %v530
    %v532 = vpop.f32.mrb[0].mxu0
    %v533 = vadd.f32 %v313, %v532
    %v534 = vpop.f32.mrb[0].mxu0
    %v535 = vadd.f32 %v309, %v534
    %v536 = vpop.f32.mrb[0].mxu0
    %v537 = vadd.f32 %v313, %v536
    %538 = vmatprep.mubr.bf16.mxu0 %v271
    %539 = vmatmul.mubr.bf16.gmra.mrb[0].mxu0 %v270
    %v540 = vpop.f32.mrb[0].mxu0
    %v541 = vadd.f32 %v309, %v540
    %v542 = vpop.f32.mrb[0].mxu0
    %v543 = vadd.f32 %v313, %v542
    %v544 = vpop.f32.mrb[0].mxu0
    %v545 = vpop.f32.mrb[0].mxu0
    %546 = vdwg.mxu0
    %v547 = vmul.f32 %v511, 0.5
    %v548 = vmul.f32 %v513, 0.5
    %v549 = vmul.f32 %v515, 0.5
    %v550 = vmul.f32 %v517, 0.5
    %v551 = vmul.f32 %v521, 0.5
    %v552 = vmul.f32 %v523, 0.5
    %v553 = vmul.f32 %v525, 0.5
    %v554 = vmul.f32 %v527, 0.5
    %v555 = vmul.f32 %v531, 0.5
    %v556 = vmul.f32 %v533, 0.5
    %v557 = vmul.f32 %v535, 0.5
    %v558 = vmul.f32 %v537, 0.5
    %v559 = vmul.f32 %v541, 0.5
    %v560 = vmul.f32 %v543, 0.5
    %v561 = vmul.f32 %v511, 0.70710677
    %v562 = vmul.f32 %v513, 0.70710677
    %v563 = vmul.f32 %v515, 0.70710677
    %v564 = vmul.f32 %v517, 0.70710677
    %v565 = vmul.f32 %v521, 0.70710677
    %v566 = vmul.f32 %v523, 0.70710677
    %v567 = vmul.f32 %v525, 0.70710677
    %v568 = vmul.f32 %v527, 0.70710677
    %v569 = vmul.f32 %v531, 0.70710677
    %v570 = vmul.f32 %v533, 0.70710677
    %v571 = vmul.f32 %v535, 0.70710677
    %v572 = vmul.f32 %v537, 0.70710677
    %v573 = vmul.f32 %v541, 0.70710677
    %v574 = vmul.f32 %v543, 0.70710677
    %v575 = verf.f32.pop %v561
    %v576 = verf.f32.pop %v562
    %v577 = verf.f32.pop %v563
    %v578 = verf.f32.pop %v564
    %v579 = verf.f32.pop %v565
    %v580 = verf.f32.pop %v566
    %v581 = verf.f32.pop %v567
    %v582 = verf.f32.pop %v568
    %v583 = verf.f32.pop %v569
    %v584 = verf.f32.pop %v570
    %v585 = verf.f32.pop %v571
    %v586 = verf.f32.pop %v572
    %v587 = verf.f32.pop %v573
    %v588 = verf.f32.pop %v574
    %v589 = vadd.f32 %v575, 1.0
    %v590 = vadd.f32 %v576, 1.0
    %v591 = vadd.f32 %v577, 1.0
    %v592 = vadd.f32 %v578, 1.0
    %v593 = vadd.f32 %v579, 1.0
    %v594 = vadd.f32 %v580, 1.0
    %v595 = vadd.f32 %v581, 1.0
    %v596 = vadd.f32 %v582, 1.0
    %v597 = vadd.f32 %v583, 1.0
    %v598 = vadd.f32 %v584, 1.0
    %v599 = vadd.f32 %v585, 1.0
    %v600 = vadd.f32 %v586, 1.0
    %v601 = vadd.f32 %v587, 1.0
    %v602 = vadd.f32 %v588, 1.0
    %v603 = vmul.f32 %v547, %v589
    %v604 = vmul.f32 %v548, %v590
    %v605 = vmul.f32 %v549, %v591
    %v606 = vmul.f32 %v550, %v592
    %v607 = vmul.f32 %v551, %v593
    %v608 = vmul.f32 %v552, %v594
    %v609 = vmul.f32 %v553, %v595
    %v610 = vmul.f32 %v554, %v596
    %v611 = vmul.f32 %v555, %v597
    %v612 = vmul.f32 %v556, %v598
    %v613 = vmul.f32 %v557, %v599
    %v614 = vmul.f32 %v558, %v600
    %v615 = vmul.f32 %v559, %v601
    %v616 = vmul.f32 %v560, %v602
    %v617 = vpack.c.bf16 %v605, %v603
    %v618 = vpack.c.bf16 %v606, %v604
    %v619 = vpack.c.bf16 %v609, %v607
    %v620 = vpack.c.bf16 %v610, %v608
    %v621 = vpack.c.bf16 %v613, %v611
    %v622 = vpack.c.bf16 %v614, %v612
    %v623 = vpack.c.bf16 %v615, %v615
    %v624 = vpack.c.bf16 %v616, %v616
    %v625 = vld [vmem:[#allocation4] sm:$0xff]
    %v626 = vld [vmem:[#allocation4 + $0x8] sm:$0xff]
    %v627 = vld [vmem:[#allocation4 + $0x10] sm:$0xff]
    %v628 = vld [vmem:[#allocation4 + $0x18] sm:$0xff]
    %v629 = vld [vmem:[#allocation4 + $0x20] sm:$0xff]
    %v630 = vld [vmem:[#allocation4 + $0x28] sm:$0xff]
    %v631 = vld [vmem:[#allocation4 + $0x30] sm:$0xff]
    %v632 = vld [vmem:[#allocation4 + $0x38] sm:$0xff]
    %v633 = vld [vmem:[#allocation4 + $0x40] sm:$0xff]
    %v634 = vld [vmem:[#allocation4 + $0x48] sm:$0xff]
    %v635 = vld [vmem:[#allocation4 + $0x50] sm:$0xff]
    %v636 = vld [vmem:[#allocation4 + $0x58] sm:$0xff]
    %v637 = vld [vmem:[#allocation4 + $0x60] sm:$0xff]
    %v638 = vld [vmem:[#allocation4 + $0x68] sm:$0xff]
    %v639 = vld [vmem:[#allocation4 + $0x70] sm:$0xff]
    %v640 = vld [vmem:[#allocation4 + $0x78] sm:$0xff]
    %v641 = vld [vmem:[#allocation4 + $0x80] sm:$0xff]
    %v642 = vld [vmem:[#allocation4 + $0x88] sm:$0xff]
    %v643 = vld [vmem:[#allocation4 + $0x90] sm:$0xff]
    %v644 = vld [vmem:[#allocation4 + $0x98] sm:$0xff]
    %v645 = vld [vmem:[#allocation4 + $0xa0] sm:$0xff]
    %v646 = vld [vmem:[#allocation4 + $0xa8] sm:$0xff]
    %v647 = vld [vmem:[#allocation4 + $0xb0] sm:$0xff]
    %v648 = vld [vmem:[#allocation4 + $0xb8] sm:$0xff]
    %v649 = vld [vmem:[#allocation4 + $0xc0] sm:$0xff]
    %v650 = vld [vmem:[#allocation4 + $0xc8] sm:$0xff]
    %v651 = vld [vmem:[#allocation4 + $0xd0] sm:$0xff]
    %v652 = vld [vmem:[#allocation4 + $0xd8] sm:$0xff]
    %v653 = vld [vmem:[#allocation4 + $0xe0] sm:$0xff]
    %v654 = vld [vmem:[#allocation4 + $0xe8] sm:$0xff]
    %v655 = vld [vmem:[#allocation4 + $0xf0] sm:$0xff]
    %v656 = vld [vmem:[#allocation4 + $0xf8] sm:$0xff]
    %v657 = vld [vmem:[%s6] sm:$0x3]
    %v659 = vlaneseq
    %v660 = vshrl.u32 %v659, 7
    %v661 = vsub.s32 0, %v660
    %v662 = vrot.slane %v657, %v661
    %v663 = vlaneseq
    %v664 = vshrl.u32 %v663, 7
    %v665 = vsub.s32 1, %v664
    %v666 = vrot.slane %v657, %v665
    %v701 = vunpack.c.l.b16 %v625
    %v702 = vunpack.c.h.b16 %v625
    %v703 = vunpack.c.l.b16 %v626
    %v704 = vunpack.c.h.b16 %v626
    %v705 = vunpack.c.l.b16 %v627
    %v706 = vunpack.c.h.b16 %v627
    %v707 = vunpack.c.l.b16 %v628
    %v708 = vunpack.c.h.b16 %v628
    %v709 = vunpack.c.l.b16 %v629
    %v710 = vunpack.c.h.b16 %v629
    %v711 = vunpack.c.l.b16 %v630
    %v712 = vunpack.c.h.b16 %v630
    %v713 = vunpack.c.l.b16 %v631
    %v714 = vunpack.c.h.b16 %v631
    %v715 = vunpack.c.l.b16 %v632
    %v716 = vunpack.c.h.b16 %v632
    %v717 = vunpack.c.l.b16 %v633
    %v718 = vunpack.c.h.b16 %v633
    %v719 = vunpack.c.l.b16 %v634
    %v720 = vunpack.c.h.b16 %v634
    %v721 = vunpack.c.l.b16 %v635
    %v722 = vunpack.c.h.b16 %v635
    %v723 = vunpack.c.l.b16 %v636
    %v724 = vunpack.c.h.b16 %v636
    %v725 = vunpack.c.l.b16 %v637
    %v726 = vunpack.c.h.b16 %v637
    %v727 = vunpack.c.l.b16 %v638
    %v728 = vunpack.c.h.b16 %v638
    %v729 = vunpack.c.l.b16 %v639
    %v730 = vunpack.c.h.b16 %v639
    %v731 = vunpack.c.l.b16 %v640
    %v732 = vunpack.c.h.b16 %v640
    %v733 = vunpack.c.l.b16 %v641
    %v734 = vunpack.c.h.b16 %v641
    %v735 = vunpack.c.l.b16 %v642
    %v736 = vunpack.c.h.b16 %v642
    %v737 = vunpack.c.l.b16 %v643
    %v738 = vunpack.c.h.b16 %v643
    %v739 = vunpack.c.l.b16 %v644
    %v740 = vunpack.c.h.b16 %v644
    %v741 = vunpack.c.l.b16 %v645
    %v742 = vunpack.c.h.b16 %v645
    %v743 = vunpack.c.l.b16 %v646
    %v744 = vunpack.c.h.b16 %v646
    %v745 = vunpack.c.l.b16 %v647
    %v746 = vunpack.c.h.b16 %v647
    %v747 = vunpack.c.l.b16 %v648
    %v748 = vunpack.c.h.b16 %v648
    %v749 = vunpack.c.l.b16 %v649
    %v750 = vunpack.c.h.b16 %v649
    %v751 = vunpack.c.l.b16 %v650
    %v752 = vunpack.c.h.b16 %v650
    %v753 = vunpack.c.l.b16 %v651
    %v754 = vunpack.c.h.b16 %v651
    %v755 = vunpack.c.l.b16 %v652
    %v756 = vunpack.c.h.b16 %v652
    %v757 = vunpack.c.l.b16 %v653
    %v758 = vunpack.c.h.b16 %v653
    %v759 = vunpack.c.l.b16 %v654
    %v760 = vunpack.c.h.b16 %v654
    %v761 = vunpack.c.l.b16 %v655
    %v762 = vunpack.c.h.b16 %v655
    %v763 = vunpack.c.l.b16 %v656
    %v764 = vunpack.c.h.b16 %v656
    %v765 = vpack.c.b16 %v703, %v701
    %v766 = vpack.c.b16 %v704, %v702
    %v767 = vpack.c.b16 %v707, %v705
    %v768 = vpack.c.b16 %v708, %v706
    %v769 = vpack.c.b16 %v711, %v709
    %v770 = vpack.c.b16 %v712, %v710
    %v771 = vpack.c.b16 %v715, %v713
    %v772 = vpack.c.b16 %v716, %v714
    %v773 = vpack.c.b16 %v719, %v717
    %v774 = vpack.c.b16 %v720, %v718
    %v775 = vpack.c.b16 %v723, %v721
    %v776 = vpack.c.b16 %v724, %v722
    %v777 = vpack.c.b16 %v727, %v725
    %v778 = vpack.c.b16 %v728, %v726
    %v779 = vpack.c.b16 %v731, %v729
    %v780 = vpack.c.b16 %v732, %v730
    %v781 = vpack.c.b16 %v735, %v733
    %v782 = vpack.c.b16 %v736, %v734
    %v783 = vpack.c.b16 %v739, %v737
    %v784 = vpack.c.b16 %v740, %v738
    %v785 = vpack.c.b16 %v743, %v741
    %v786 = vpack.c.b16 %v744, %v742
    %v787 = vpack.c.b16 %v747, %v745
    %v788 = vpack.c.b16 %v748, %v746
    %v789 = vpack.c.b16 %v751, %v749
    %v790 = vpack.c.b16 %v752, %v750
    %v791 = vpack.c.b16 %v755, %v753
    %v792 = vpack.c.b16 %v756, %v754
    %v793 = vpack.c.b16 %v759, %v757
    %v794 = vpack.c.b16 %v760, %v758
    %v795 = vpack.c.b16 %v763, %v761
    %v796 = vpack.c.b16 %v764, %v762
    %829 = vmatprep.subr.bf16.mxu0 %v766
    %830 = vmatpush1.bf16.msra.mxu0 %v765
    %831 = vmatprep.subr.bf16.mxu0 %v768
    %832 = vmatpush1.bf16.msra.mxu0 %v767
    %833 = vmatprep.subr.bf16.mxu0 %v770
    %834 = vmatpush1.bf16.msra.mxu0 %v769
    %835 = vmatprep.subr.bf16.mxu0 %v772
    %836 = vmatpush1.bf16.msra.mxu0 %v771
    %837 = vmatprep.subr.bf16.mxu0 %v774
    %838 = vmatpush1.bf16.msra.mxu0 %v773
    %839 = vmatprep.subr.bf16.mxu0 %v776
    %840 = vmatpush1.bf16.msra.mxu0 %v775
    %841 = vmatprep.subr.bf16.mxu0 %v778
    %842 = vmatpush1.bf16.msra.mxu0 %v777
    %843 = vmatprep.subr.bf16.mxu0 %v780
    %844 = vmatpush1.bf16.msra.mxu0 %v779
    %845 = vmatprep.subr.bf16.mxu0 %v782
    %846 = vmatpush1.bf16.msra.mxu0 %v781
    %847 = vmatprep.subr.bf16.mxu0 %v784
    %848 = vmatpush1.bf16.msra.mxu0 %v783
    %849 = vmatprep.subr.bf16.mxu0 %v786
    %850 = vmatpush1.bf16.msra.mxu0 %v785
    %851 = vmatprep.subr.bf16.mxu0 %v788
    %852 = vmatpush1.bf16.msra.mxu0 %v787
    %853 = vmatprep.subr.bf16.mxu0 %v790
    %854 = vmatpush1.bf16.msra.mxu0 %v789
    %855 = vmatprep.subr.bf16.mxu0 %v792
    %856 = vmatpush1.bf16.msra.mxu0 %v791
    %857 = vmatprep.subr.bf16.mxu0 %v794
    %858 = vmatpush1.bf16.msra.mxu0 %v793
    %859 = vmatprep.subr.bf16.mxu0 %v796
    %860 = vmatpush1.bf16.msra.mxu0 %v795
    %861 = vmatprep.mubr.bf16.mxu0 %v618
    %862 = vmatmul.mubr.bf16.gmra.mrb[0].mxu0 %v617
    %v863 = vpop.f32.mrb[0].mxu0
    %v864 = vadd.f32 %v662, %v863
    %v865 = vpop.f32.mrb[0].mxu0
    %v866 = vadd.f32 %v666, %v865
    %v867 = vpop.f32.mrb[0].mxu0
    %v868 = vadd.f32 %v662, %v867
    %v869 = vpop.f32.mrb[0].mxu0
    %v870 = vadd.f32 %v666, %v869
    %871 = vmatprep.mubr.bf16.mxu0 %v620
    %872 = vmatmul.mubr.bf16.gmra.mrb[0].mxu0 %v619
    %v873 = vpop.f32.mrb[0].mxu0
    %v874 = vadd.f32 %v662, %v873
    %v875 = vpop.f32.mrb[0].mxu0
    %v876 = vadd.f32 %v666, %v875
    %v877 = vpop.f32.mrb[0].mxu0
    %v878 = vadd.f32 %v662, %v877
    %v879 = vpop.f32.mrb[0].mxu0
    %v880 = vadd.f32 %v666, %v879
    %881 = vmatprep.mubr.bf16.mxu0 %v622
    %882 = vmatmul.mubr.bf16.gmra.mrb[0].mxu0 %v621
    %v883 = vpop.f32.mrb[0].mxu0
    %v884 = vadd.f32 %v662, %v883
    %v885 = vpop.f32.mrb[0].mxu0
    %v886 = vadd.f32 %v666, %v885
    %v887 = vpop.f32.mrb[0].mxu0
    %v888 = vadd.f32 %v662, %v887
    %v889 = vpop.f32.mrb[0].mxu0
    %v890 = vadd.f32 %v666, %v889
    %891 = vmatprep.mubr.bf16.mxu0 %v624
    %892 = vmatmul.mubr.bf16.gmra.mrb[0].mxu0 %v623
    %v893 = vpop.f32.mrb[0].mxu0
    %v894 = vadd.f32 %v662, %v893
    %v895 = vpop.f32.mrb[0].mxu0
    %v896 = vadd.f32 %v666, %v895
    %v897 = vpop.f32.mrb[0].mxu0
    %v898 = vpop.f32.mrb[0].mxu0
    %899 = vdwg.mxu0
    %v900 = vmul.f32 %v864, 0.5
    %v901 = vmul.f32 %v866, 0.5
    %v902 = vmul.f32 %v868, 0.5
    %v903 = vmul.f32 %v870, 0.5
    %v904 = vmul.f32 %v874, 0.5
    %v905 = vmul.f32 %v876, 0.5
    %v906 = vmul.f32 %v878, 0.5
    %v907 = vmul.f32 %v880, 0.5
    %v908 = vmul.f32 %v884, 0.5
    %v909 = vmul.f32 %v886, 0.5
    %v910 = vmul.f32 %v888, 0.5
    %v911 = vmul.f32 %v890, 0.5
    %v912 = vmul.f32 %v894, 0.5
    %v913 = vmul.f32 %v896, 0.5
    %v914 = vmul.f32 %v864, 0.70710677
    %v915 = vmul.f32 %v866, 0.70710677
    %v916 = vmul.f32 %v868, 0.70710677
    %v917 = vmul.f32 %v870, 0.70710677
    %v918 = vmul.f32 %v874, 0.70710677
    %v919 = vmul.f32 %v876, 0.70710677
    %v920 = vmul.f32 %v878, 0.70710677
    %v921 = vmul.f32 %v880, 0.70710677
    %v922 = vmul.f32 %v884, 0.70710677
    %v923 = vmul.f32 %v886, 0.70710677
    %v924 = vmul.f32 %v888, 0.70710677
    %v925 = vmul.f32 %v890, 0.70710677
    %v926 = vmul.f32 %v894, 0.70710677
    %v927 = vmul.f32 %v896, 0.70710677
    %v928 = verf.f32.pop %v914
    %v929 = verf.f32.pop %v915
    %v930 = verf.f32.pop %v916
    %v931 = verf.f32.pop %v917
    %v932 = verf.f32.pop %v918
    %v933 = verf.f32.pop %v919
    %v934 = verf.f32.pop %v920
    %v935 = verf.f32.pop %v921
    %v936 = verf.f32.pop %v922
    %v937 = verf.f32.pop %v923
    %v938 = verf.f32.pop %v924
    %v939 = verf.f32.pop %v925
    %v940 = verf.f32.pop %v926
    %v941 = verf.f32.pop %v927
    %v942 = vadd.f32 %v928, 1.0
    %v943 = vadd.f32 %v929, 1.0
    %v944 = vadd.f32 %v930, 1.0
    %v945 = vadd.f32 %v931, 1.0
    %v946 = vadd.f32 %v932, 1.0
    %v947 = vadd.f32 %v933, 1.0
    %v948 = vadd.f32 %v934, 1.0
    %v949 = vadd.f32 %v935, 1.0
    %v950 = vadd.f32 %v936, 1.0
    %v951 = vadd.f32 %v937, 1.0
    %v952 = vadd.f32 %v938, 1.0
    %v953 = vadd.f32 %v939, 1.0
    %v954 = vadd.f32 %v940, 1.0
    %v955 = vadd.f32 %v941, 1.0
    %v956 = vmul.f32 %v900, %v942
    %v957 = vmul.f32 %v901, %v943
    %v958 = vmul.f32 %v902, %v944
    %v959 = vmul.f32 %v903, %v945
    %v960 = vmul.f32 %v904, %v946
    %v961 = vmul.f32 %v905, %v947
    %v962 = vmul.f32 %v906, %v948
    %v963 = vmul.f32 %v907, %v949
    %v964 = vmul.f32 %v908, %v950
    %v965 = vmul.f32 %v909, %v951
    %v966 = vmul.f32 %v910, %v952
    %v967 = vmul.f32 %v911, %v953
    %v968 = vmul.f32 %v912, %v954
    %v969 = vmul.f32 %v913, %v955
    %v970 = vpack.c.bf16 %v958, %v956
    %v971 = vpack.c.bf16 %v959, %v957
    %v972 = vpack.c.bf16 %v962, %v960
    %v973 = vpack.c.bf16 %v963, %v961
    %v974 = vpack.c.bf16 %v966, %v964
    %v975 = vpack.c.bf16 %v967, %v965
    %v976 = vpack.c.bf16 %v968, %v968
    %v977 = vpack.c.bf16 %v969, %v969
    %v978 = vld [vmem:[#allocation6] sm:$0xff]
    %v979 = vld [vmem:[#allocation6 + $0x8] sm:$0xff]
    %v980 = vld [vmem:[#allocation6 + $0x10] sm:$0xff]
    %v981 = vld [vmem:[#allocation6 + $0x18] sm:$0xff]
    %v982 = vld [vmem:[#allocation6 + $0x20] sm:$0xff]
    %v983 = vld [vmem:[#allocation6 + $0x28] sm:$0xff]
    %v984 = vld [vmem:[#allocation6 + $0x30] sm:$0xff]
    %v985 = vld [vmem:[#allocation6 + $0x38] sm:$0xff]
    %v986 = vld [vmem:[#allocation6 + $0x40] sm:$0xff]
    %v987 = vld [vmem:[#allocation6 + $0x48] sm:$0xff]
    %v988 = vld [vmem:[#allocation6 + $0x50] sm:$0xff]
    %v989 = vld [vmem:[#allocation6 + $0x58] sm:$0xff]
    %v990 = vld [vmem:[#allocation6 + $0x60] sm:$0xff]
    %v991 = vld [vmem:[#allocation6 + $0x68] sm:$0xff]
    %v992 = vld [vmem:[#allocation6 + $0x70] sm:$0xff]
    %v993 = vld [vmem:[#allocation6 + $0x78] sm:$0xff]
    %v994 = vld [vmem:[#allocation6 + $0x80] sm:$0xff]
    %v995 = vld [vmem:[#allocation6 + $0x88] sm:$0xff]
    %v996 = vld [vmem:[#allocation6 + $0x90] sm:$0xff]
    %v997 = vld [vmem:[#allocation6 + $0x98] sm:$0xff]
    %v998 = vld [vmem:[#allocation6 + $0xa0] sm:$0xff]
    %v999 = vld [vmem:[#allocation6 + $0xa8] sm:$0xff]
    %v1000 = vld [vmem:[#allocation6 + $0xb0] sm:$0xff]
    %v1001 = vld [vmem:[#allocation6 + $0xb8] sm:$0xff]
    %v1002 = vld [vmem:[#allocation6 + $0xc0] sm:$0xff]
    %v1003 = vld [vmem:[#allocation6 + $0xc8] sm:$0xff]
    %v1004 = vld [vmem:[#allocation6 + $0xd0] sm:$0xff]
    %v1005 = vld [vmem:[#allocation6 + $0xd8] sm:$0xff]
    %v1006 = vld [vmem:[#allocation6 + $0xe0] sm:$0xff]
    %v1007 = vld [vmem:[#allocation6 + $0xe8] sm:$0xff]
    %v1008 = vld [vmem:[#allocation6 + $0xf0] sm:$0xff]
    %v1009 = vld [vmem:[#allocation6 + $0xf8] sm:$0xff]
    %v1010 = vld [vmem:[%s8] sm:$0x3]
    %v1012 = vlaneseq
    %v1013 = vshrl.u32 %v1012, 7
    %v1014 = vsub.s32 0, %v1013
    %v1015 = vrot.slane %v1010, %v1014
    %v1016 = vlaneseq
    %v1017 = vshrl.u32 %v1016, 7
    %v1018 = vsub.s32 1, %v1017
    %v1019 = vrot.slane %v1010, %v1018
    %v1054 = vunpack.c.l.b16 %v978
    %v1055 = vunpack.c.h.b16 %v978
    %v1056 = vunpack.c.l.b16 %v979
    %v1057 = vunpack.c.h.b16 %v979
    %v1058 = vunpack.c.l.b16 %v980
    %v1059 = vunpack.c.h.b16 %v980
    %v1060 = vunpack.c.l.b16 %v981
    %v1061 = vunpack.c.h.b16 %v981
    %v1062 = vunpack.c.l.b16 %v982
    %v1063 = vunpack.c.h.b16 %v982
    %v1064 = vunpack.c.l.b16 %v983
    %v1065 = vunpack.c.h.b16 %v983
    %v1066 = vunpack.c.l.b16 %v984
    %v1067 = vunpack.c.h.b16 %v984
    %v1068 = vunpack.c.l.b16 %v985
    %v1069 = vunpack.c.h.b16 %v985
    %v1070 = vunpack.c.l.b16 %v986
    %v1071 = vunpack.c.h.b16 %v986
    %v1072 = vunpack.c.l.b16 %v987
    %v1073 = vunpack.c.h.b16 %v987
    %v1074 = vunpack.c.l.b16 %v988
    %v1075 = vunpack.c.h.b16 %v988
    %v1076 = vunpack.c.l.b16 %v989
    %v1077 = vunpack.c.h.b16 %v989
    %v1078 = vunpack.c.l.b16 %v990
    %v1079 = vunpack.c.h.b16 %v990
    %v1080 = vunpack.c.l.b16 %v991
    %v1081 = vunpack.c.h.b16 %v991
    %v1082 = vunpack.c.l.b16 %v992
    %v1083 = vunpack.c.h.b16 %v992
    %v1084 = vunpack.c.l.b16 %v993
    %v1085 = vunpack.c.h.b16 %v993
    %v1086 = vunpack.c.l.b16 %v994
    %v1087 = vunpack.c.h.b16 %v994
    %v1088 = vunpack.c.l.b16 %v995
    %v1089 = vunpack.c.h.b16 %v995
    %v1090 = vunpack.c.l.b16 %v996
    %v1091 = vunpack.c.h.b16 %v996
    %v1092 = vunpack.c.l.b16 %v997
    %v1093 = vunpack.c.h.b16 %v997
    %v1094 = vunpack.c.l.b16 %v998
    %v1095 = vunpack.c.h.b16 %v998
    %v1096 = vunpack.c.l.b16 %v999
    %v1097 = vunpack.c.h.b16 %v999
    %v1098 = vunpack.c.l.b16 %v1000
    %v1099 = vunpack.c.h.b16 %v1000
    %v1100 = vunpack.c.l.b16 %v1001
    %v1101 = vunpack.c.h.b16 %v1001
    %v1102 = vunpack.c.l.b16 %v1002
    %v1103 = vunpack.c.h.b16 %v1002
    %v1104 = vunpack.c.l.b16 %v1003
    %v1105 = vunpack.c.h.b16 %v1003
    %v1106 = vunpack.c.l.b16 %v1004
    %v1107 = vunpack.c.h.b16 %v1004
    %v1108 = vunpack.c.l.b16 %v1005
    %v1109 = vunpack.c.h.b16 %v1005
    %v1110 = vunpack.c.l.b16 %v1006
    %v1111 = vunpack.c.h.b16 %v1006
    %v1112 = vunpack.c.l.b16 %v1007
    %v1113 = vunpack.c.h.b16 %v1007
    %v1114 = vunpack.c.l.b16 %v1008
    %v1115 = vunpack.c.h.b16 %v1008
    %v1116 = vunpack.c.l.b16 %v1009
    %v1117 = vunpack.c.h.b16 %v1009
    %v1118 = vpack.c.b16 %v1056, %v1054
    %v1119 = vpack.c.b16 %v1057, %v1055
    %v1120 = vpack.c.b16 %v1060, %v1058
    %v1121 = vpack.c.b16 %v1061, %v1059
    %v1122 = vpack.c.b16 %v1064, %v1062
    %v1123 = vpack.c.b16 %v1065, %v1063
    %v1124 = vpack.c.b16 %v1068, %v1066
    %v1125 = vpack.c.b16 %v1069, %v1067
    %v1126 = vpack.c.b16 %v1072, %v1070
    %v1127 = vpack.c.b16 %v1073, %v1071
    %v1128 = vpack.c.b16 %v1076, %v1074
    %v1129 = vpack.c.b16 %v1077, %v1075
    %v1130 = vpack.c.b16 %v1080, %v1078
    %v1131 = vpack.c.b16 %v1081, %v1079
    %v1132 = vpack.c.b16 %v1084, %v1082
    %v1133 = vpack.c.b16 %v1085, %v1083
    %v1134 = vpack.c.b16 %v1088, %v1086
    %v1135 = vpack.c.b16 %v1089, %v1087
    %v1136 = vpack.c.b16 %v1092, %v1090
    %v1137 = vpack.c.b16 %v1093, %v1091
    %v1138 = vpack.c.b16 %v1096, %v1094
    %v1139 = vpack.c.b16 %v1097, %v1095
    %v1140 = vpack.c.b16 %v1100, %v1098
    %v1141 = vpack.c.b16 %v1101, %v1099
    %v1142 = vpack.c.b16 %v1104, %v1102
    %v1143 = vpack.c.b16 %v1105, %v1103
    %v1144 = vpack.c.b16 %v1108, %v1106
    %v1145 = vpack.c.b16 %v1109, %v1107
    %v1146 = vpack.c.b16 %v1112, %v1110
    %v1147 = vpack.c.b16 %v1113, %v1111
    %v1148 = vpack.c.b16 %v1116, %v1114
    %v1149 = vpack.c.b16 %v1117, %v1115
    %1182 = vmatprep.subr.bf16.mxu0 %v1119
    %1183 = vmatpush1.bf16.msra.mxu0 %v1118
    %1184 = vmatprep.subr.bf16.mxu0 %v1121
    %1185 = vmatpush1.bf16.msra.mxu0 %v1120
    %1186 = vmatprep.subr.bf16.mxu0 %v1123
    %1187 = vmatpush1.bf16.msra.mxu0 %v1122
    %1188 = vmatprep.subr.bf16.mxu0 %v1125
    %1189 = vmatpush1.bf16.msra.mxu0 %v1124
    %1190 = vmatprep.subr.bf16.mxu0 %v1127
    %1191 = vmatpush1.bf16.msra.mxu0 %v1126
    %1192 = vmatprep.subr.bf16.mxu0 %v1129
    %1193 = vmatpush1.bf16.msra.mxu0 %v1128
    %1194 = vmatprep.subr.bf16.mxu0 %v1131
    %1195 = vmatpush1.bf16.msra.mxu0 %v1130
    %1196 = vmatprep.subr.bf16.mxu0 %v1133
    %1197 = vmatpush1.bf16.msra.mxu0 %v1132
    %1198 = vmatprep.subr.bf16.mxu0 %v1135
    %1199 = vmatpush1.bf16.msra.mxu0 %v1134
    %1200 = vmatprep.subr.bf16.mxu0 %v1137
    %1201 = vmatpush1.bf16.msra.mxu0 %v1136
    %1202 = vmatprep.subr.bf16.mxu0 %v1139
    %1203 = vmatpush1.bf16.msra.mxu0 %v1138
    %1204 = vmatprep.subr.bf16.mxu0 %v1141
    %1205 = vmatpush1.bf16.msra.mxu0 %v1140
    %1206 = vmatprep.subr.bf16.mxu0 %v1143
    %1207 = vmatpush1.bf16.msra.mxu0 %v1142
    %1208 = vmatprep.subr.bf16.mxu0 %v1145
    %1209 = vmatpush1.bf16.msra.mxu0 %v1144
    %1210 = vmatprep.subr.bf16.mxu0 %v1147
    %1211 = vmatpush1.bf16.msra.mxu0 %v1146
    %1212 = vmatprep.subr.bf16.mxu0 %v1149
    %1213 = vmatpush1.bf16.msra.mxu0 %v1148
    %1214 = vmatprep.mubr.bf16.mxu0 %v971
    %1215 = vmatmul.mubr.bf16.gmra.mrb[0].mxu0 %v970
    %v1216 = vpop.f32.mrb[0].mxu0
    %v1217 = vadd.f32 %v1015, %v1216
    %v1218 = vpop.f32.mrb[0].mxu0
    %v1219 = vadd.f32 %v1019, %v1218
    %v1220 = vpop.f32.mrb[0].mxu0
    %v1221 = vadd.f32 %v1015, %v1220
    %v1222 = vpop.f32.mrb[0].mxu0
    %v1223 = vadd.f32 %v1019, %v1222
    %1224 = vmatprep.mubr.bf16.mxu0 %v973
    %1225 = vmatmul.mubr.bf16.gmra.mrb[0].mxu0 %v972
    %v1226 = vpop.f32.mrb[0].mxu0
    %v1227 = vadd.f32 %v1015, %v1226
    %v1228 = vpop.f32.mrb[0].mxu0
    %v1229 = vadd.f32 %v1019, %v1228
    %v1230 = vpop.f32.mrb[0].mxu0
    %v1231 = vadd.f32 %v1015, %v1230
    %v1232 = vpop.f32.mrb[0].mxu0
    %v1233 = vadd.f32 %v1019, %v1232
    %1234 = vmatprep.mubr.bf16.mxu0 %v975
    %1235 = vmatmul.mubr.bf16.gmra.mrb[0].mxu0 %v974
    %v1236 = vpop.f32.mrb[0].mxu0
    %v1237 = vadd.f32 %v1015, %v1236
    %v1238 = vpop.f32.mrb[0].mxu0
    %v1239 = vadd.f32 %v1019, %v1238
    %v1240 = vpop.f32.mrb[0].mxu0
    %v1241 = vadd.f32 %v1015, %v1240
    %v1242 = vpop.f32.mrb[0].mxu0
    %v1243 = vadd.f32 %v1019, %v1242
    %1244 = vmatprep.mubr.bf16.mxu0 %v977
    %1245 = vmatmul.mubr.bf16.gmra.mrb[0].mxu0 %v976
    %v1246 = vpop.f32.mrb[0].mxu0
    %v1247 = vadd.f32 %v1015, %v1246
    %v1248 = vpop.f32.mrb[0].mxu0
    %v1249 = vadd.f32 %v1019, %v1248
    %v1250 = vpop.f32.mrb[0].mxu0
    %v1251 = vpop.f32.mrb[0].mxu0
    %1252 = vdwg.mxu0
    %v1253 = vmul.f32 %v1217, 0.5
    %v1254 = vmul.f32 %v1219, 0.5
    %v1255 = vmul.f32 %v1221, 0.5
    %v1256 = vmul.f32 %v1223, 0.5
    %v1257 = vmul.f32 %v1227, 0.5
    %v1258 = vmul.f32 %v1229, 0.5
    %v1259 = vmul.f32 %v1231, 0.5
    %v1260 = vmul.f32 %v1233, 0.5
    %v1261 = vmul.f32 %v1237, 0.5
    %v1262 = vmul.f32 %v1239, 0.5
    %v1263 = vmul.f32 %v1241, 0.5
    %v1264 = vmul.f32 %v1243, 0.5
    %v1265 = vmul.f32 %v1247, 0.5
    %v1266 = vmul.f32 %v1249, 0.5
    %v1267 = vmul.f32 %v1217, 0.70710677
    %v1268 = vmul.f32 %v1219, 0.70710677
    %v1269 = vmul.f32 %v1221, 0.70710677
    %v1270 = vmul.f32 %v1223, 0.70710677
    %v1271 = vmul.f32 %v1227, 0.70710677
    %v1272 = vmul.f32 %v1229, 0.70710677
    %v1273 = vmul.f32 %v1231, 0.70710677
    %v1274 = vmul.f32 %v1233, 0.70710677
    %v1275 = vmul.f32 %v1237, 0.70710677
    %v1276 = vmul.f32 %v1239, 0.70710677
    %v1277 = vmul.f32 %v1241, 0.70710677
    %v1278 = vmul.f32 %v1243, 0.70710677
    %v1279 = vmul.f32 %v1247, 0.70710677
    %v1280 = vmul.f32 %v1249, 0.70710677
    %v1281 = verf.f32.pop %v1267
    %v1282 = verf.f32.pop %v1268
    %v1283 = verf.f32.pop %v1269
    %v1284 = verf.f32.pop %v1270
    %v1285 = verf.f32.pop %v1271
    %v1286 = verf.f32.pop %v1272
    %v1287 = verf.f32.pop %v1273
    %v1288 = verf.f32.pop %v1274
    %v1289 = verf.f32.pop %v1275
    %v1290 = verf.f32.pop %v1276
    %v1291 = verf.f32.pop %v1277
    %v1292 = verf.f32.pop %v1278
    %v1293 = verf.f32.pop %v1279
    %v1294 = verf.f32.pop %v1280
    %v1295 = vadd.f32 %v1281, 1.0
    %v1296 = vadd.f32 %v1282, 1.0
    %v1297 = vadd.f32 %v1283, 1.0
    %v1298 = vadd.f32 %v1284, 1.0
    %v1299 = vadd.f32 %v1285, 1.0
    %v1300 = vadd.f32 %v1286, 1.0
    %v1301 = vadd.f32 %v1287, 1.0
    %v1302 = vadd.f32 %v1288, 1.0
    %v1303 = vadd.f32 %v1289, 1.0
    %v1304 = vadd.f32 %v1290, 1.0
    %v1305 = vadd.f32 %v1291, 1.0
    %v1306 = vadd.f32 %v1292, 1.0
    %v1307 = vadd.f32 %v1293, 1.0
    %v1308 = vadd.f32 %v1294, 1.0
    %v1309 = vmul.f32 %v1253, %v1295
    %v1310 = vmul.f32 %v1254, %v1296
    %v1311 = vmul.f32 %v1255, %v1297
    %v1312 = vmul.f32 %v1256, %v1298
    %v1313 = vmul.f32 %v1257, %v1299
    %v1314 = vmul.f32 %v1258, %v1300
    %v1315 = vmul.f32 %v1259, %v1301
    %v1316 = vmul.f32 %v1260, %v1302
    %v1317 = vmul.f32 %v1261, %v1303
    %v1318 = vmul.f32 %v1262, %v1304
    %v1319 = vmul.f32 %v1263, %v1305
    %v1320 = vmul.f32 %v1264, %v1306
    %v1321 = vmul.f32 %v1265, %v1307
    %v1322 = vmul.f32 %v1266, %v1308
    %v1323 = vpack.c.bf16 %v1311, %v1309
    %v1324 = vpack.c.bf16 %v1312, %v1310
    %v1325 = vpack.c.bf16 %v1315, %v1313
    %v1326 = vpack.c.bf16 %v1316, %v1314
    %v1327 = vpack.c.bf16 %v1319, %v1317
    %v1328 = vpack.c.bf16 %v1320, %v1318
    %v1329 = vpack.c.bf16 %v1321, %v1321
    %v1330 = vpack.c.bf16 %v1322, %v1322
    %v1331 = vld [vmem:[#allocation7] sm:$0xff]
    %v1332 = vld [vmem:[#allocation7 + $0x8] sm:$0xff]
    %v1333 = vld [vmem:[#allocation7 + $0x10] sm:$0xff]
    %v1334 = vld [vmem:[#allocation7 + $0x18] sm:$0xff]
    %v1335 = vld [vmem:[#allocation7 + $0x20] sm:$0xff]
    %v1336 = vld [vmem:[#allocation7 + $0x28] sm:$0xff]
    %v1337 = vld [vmem:[#allocation7 + $0x30] sm:$0xff]
    %v1338 = vld [vmem:[#allocation7 + $0x38] sm:$0xff]
    %v1339 = vld [vmem:[#allocation7 + $0x40] sm:$0xff]
    %v1340 = vld [vmem:[#allocation7 + $0x48] sm:$0xff]
    %v1341 = vld [vmem:[#allocation7 + $0x50] sm:$0xff]
    %v1342 = vld [vmem:[#allocation7 + $0x58] sm:$0xff]
    %v1343 = vld [vmem:[#allocation7 + $0x60] sm:$0xff]
    %v1344 = vld [vmem:[#allocation7 + $0x68] sm:$0xff]
    %v1345 = vld [vmem:[#allocation7 + $0x70] sm:$0xff]
    %v1346 = vld [vmem:[#allocation7 + $0x78] sm:$0xff]
    %v1347 = vld [vmem:[#allocation7 + $0x80] sm:$0xff]
    %v1348 = vld [vmem:[#allocation7 + $0x88] sm:$0xff]
    %v1349 = vld [vmem:[#allocation7 + $0x90] sm:$0xff]
    %v1350 = vld [vmem:[#allocation7 + $0x98] sm:$0xff]
    %v1351 = vld [vmem:[#allocation7 + $0xa0] sm:$0xff]
    %v1352 = vld [vmem:[#allocation7 + $0xa8] sm:$0xff]
    %v1353 = vld [vmem:[#allocation7 + $0xb0] sm:$0xff]
    %v1354 = vld [vmem:[#allocation7 + $0xb8] sm:$0xff]
    %v1355 = vld [vmem:[#allocation7 + $0xc0] sm:$0xff]
    %v1356 = vld [vmem:[#allocation7 + $0xc8] sm:$0xff]
    %v1357 = vld [vmem:[#allocation7 + $0xd0] sm:$0xff]
    %v1358 = vld [vmem:[#allocation7 + $0xd8] sm:$0xff]
    %v1359 = vld [vmem:[#allocation7 + $0xe0] sm:$0xff]
    %v1360 = vld [vmem:[#allocation7 + $0xe8] sm:$0xff]
    %v1361 = vld [vmem:[#allocation7 + $0xf0] sm:$0xff]
    %v1362 = vld [vmem:[#allocation7 + $0xf8] sm:$0xff]
    %v1363 = vld [vmem:[%s10] sm:$0x3]
    %v1365 = vlaneseq
    %v1366 = vshrl.u32 %v1365, 7
    %v1367 = vsub.s32 0, %v1366
    %v1368 = vrot.slane %v1363, %v1367
    %v1369 = vlaneseq
    %v1370 = vshrl.u32 %v1369, 7
    %v1371 = vsub.s32 1, %v1370
    %v1372 = vrot.slane %v1363, %v1371
    %v1407 = vunpack.c.l.b16 %v1331
    %v1408 = vunpack.c.h.b16 %v1331
    %v1409 = vunpack.c.l.b16 %v1332
    %v1410 = vunpack.c.h.b16 %v1332
    %v1411 = vunpack.c.l.b16 %v1333
    %v1412 = vunpack.c.h.b16 %v1333
    %v1413 = vunpack.c.l.b16 %v1334
    %v1414 = vunpack.c.h.b16 %v1334
    %v1415 = vunpack.c.l.b16 %v1335
    %v1416 = vunpack.c.h.b16 %v1335
    %v1417 = vunpack.c.l.b16 %v1336
    %v1418 = vunpack.c.h.b16 %v1336
    %v1419 = vunpack.c.l.b16 %v1337
    %v1420 = vunpack.c.h.b16 %v1337
    %v1421 = vunpack.c.l.b16 %v1338
    %v1422 = vunpack.c.h.b16 %v1338
    %v1423 = vunpack.c.l.b16 %v1339
    %v1424 = vunpack.c.h.b16 %v1339
    %v1425 = vunpack.c.l.b16 %v1340
    %v1426 = vunpack.c.h.b16 %v1340
    %v1427 = vunpack.c.l.b16 %v1341
    %v1428 = vunpack.c.h.b16 %v1341
    %v1429 = vunpack.c.l.b16 %v1342
    %v1430 = vunpack.c.h.b16 %v1342
    %v1431 = vunpack.c.l.b16 %v1343
    %v1432 = vunpack.c.h.b16 %v1343
    %v1433 = vunpack.c.l.b16 %v1344
    %v1434 = vunpack.c.h.b16 %v1344
    %v1435 = vunpack.c.l.b16 %v1345
    %v1436 = vunpack.c.h.b16 %v1345
    %v1437 = vunpack.c.l.b16 %v1346
    %v1438 = vunpack.c.h.b16 %v1346
    %v1439 = vunpack.c.l.b16 %v1347
    %v1440 = vunpack.c.h.b16 %v1347
    %v1441 = vunpack.c.l.b16 %v1348
    %v1442 = vunpack.c.h.b16 %v1348
    %v1443 = vunpack.c.l.b16 %v1349
    %v1444 = vunpack.c.h.b16 %v1349
    %v1445 = vunpack.c.l.b16 %v1350
    %v1446 = vunpack.c.h.b16 %v1350
    %v1447 = vunpack.c.l.b16 %v1351
    %v1448 = vunpack.c.h.b16 %v1351
    %v1449 = vunpack.c.l.b16 %v1352
    %v1450 = vunpack.c.h.b16 %v1352
    %v1451 = vunpack.c.l.b16 %v1353
    %v1452 = vunpack.c.h.b16 %v1353
    %v1453 = vunpack.c.l.b16 %v1354
    %v1454 = vunpack.c.h.b16 %v1354
    %v1455 = vunpack.c.l.b16 %v1355
    %v1456 = vunpack.c.h.b16 %v1355
    %v1457 = vunpack.c.l.b16 %v1356
    %v1458 = vunpack.c.h.b16 %v1356
    %v1459 = vunpack.c.l.b16 %v1357
    %v1460 = vunpack.c.h.b16 %v1357
    %v1461 = vunpack.c.l.b16 %v1358
    %v1462 = vunpack.c.h.b16 %v1358
    %v1463 = vunpack.c.l.b16 %v1359
    %v1464 = vunpack.c.h.b16 %v1359
    %v1465 = vunpack.c.l.b16 %v1360
    %v1466 = vunpack.c.h.b16 %v1360
    %v1467 = vunpack.c.l.b16 %v1361
    %v1468 = vunpack.c.h.b16 %v1361
    %v1469 = vunpack.c.l.b16 %v1362
    %v1470 = vunpack.c.h.b16 %v1362
    %v1471 = vpack.c.b16 %v1409, %v1407
    %v1472 = vpack.c.b16 %v1410, %v1408
    %v1473 = vpack.c.b16 %v1413, %v1411
    %v1474 = vpack.c.b16 %v1414, %v1412
    %v1475 = vpack.c.b16 %v1417, %v1415
    %v1476 = vpack.c.b16 %v1418, %v1416
    %v1477 = vpack.c.b16 %v1421, %v1419
    %v1478 = vpack.c.b16 %v1422, %v1420
    %v1479 = vpack.c.b16 %v1425, %v1423
    %v1480 = vpack.c.b16 %v1426, %v1424
    %v1481 = vpack.c.b16 %v1429, %v1427
    %v1482 = vpack.c.b16 %v1430, %v1428
    %v1483 = vpack.c.b16 %v1433, %v1431
    %v1484 = vpack.c.b16 %v1434, %v1432
    %v1485 = vpack.c.b16 %v1437, %v1435
    %v1486 = vpack.c.b16 %v1438, %v1436
    %v1487 = vpack.c.b16 %v1441, %v1439
    %v1488 = vpack.c.b16 %v1442, %v1440
    %v1489 = vpack.c.b16 %v1445, %v1443
    %v1490 = vpack.c.b16 %v1446, %v1444
    %v1491 = vpack.c.b16 %v1449, %v1447
    %v1492 = vpack.c.b16 %v1450, %v1448
    %v1493 = vpack.c.b16 %v1453, %v1451
    %v1494 = vpack.c.b16 %v1454, %v1452
    %v1495 = vpack.c.b16 %v1457, %v1455
    %v1496 = vpack.c.b16 %v1458, %v1456
    %v1497 = vpack.c.b16 %v1461, %v1459
    %v1498 = vpack.c.b16 %v1462, %v1460
    %v1499 = vpack.c.b16 %v1465, %v1463
    %v1500 = vpack.c.b16 %v1466, %v1464
    %v1501 = vpack.c.b16 %v1469, %v1467
    %v1502 = vpack.c.b16 %v1470, %v1468
    %1535 = vmatprep.subr.bf16.mxu0 %v1472
    %1536 = vmatpush1.bf16.msra.mxu0 %v1471
    %1537 = vmatprep.subr.bf16.mxu0 %v1474
    %1538 = vmatpush1.bf16.msra.mxu0 %v1473
    %1539 = vmatprep.subr.bf16.mxu0 %v1476
    %1540 = vmatpush1.bf16.msra.mxu0 %v1475
    %1541 = vmatprep.subr.bf16.mxu0 %v1478
    %1542 = vmatpush1.bf16.msra.mxu0 %v1477
    %1543 = vmatprep.subr.bf16.mxu0 %v1480
    %1544 = vmatpush1.bf16.msra.mxu0 %v1479
    %1545 = vmatprep.subr.bf16.mxu0 %v1482
    %1546 = vmatpush1.bf16.msra.mxu0 %v1481
    %1547 = vmatprep.subr.bf16.mxu0 %v1484
    %1548 = vmatpush1.bf16.msra.mxu0 %v1483
    %1549 = vmatprep.subr.bf16.mxu0 %v1486
    %1550 = vmatpush1.bf16.msra.mxu0 %v1485
    %1551 = vmatprep.subr.bf16.mxu0 %v1488
    %1552 = vmatpush1.bf16.msra.mxu0 %v1487
    %1553 = vmatprep.subr.bf16.mxu0 %v1490
    %1554 = vmatpush1.bf16.msra.mxu0 %v1489
    %1555 = vmatprep.subr.bf16.mxu0 %v1492
    %1556 = vmatpush1.bf16.msra.mxu0 %v1491
    %1557 = vmatprep.subr.bf16.mxu0 %v1494
    %1558 = vmatpush1.bf16.msra.mxu0 %v1493
    %1559 = vmatprep.subr.bf16.mxu0 %v1496
    %1560 = vmatpush1.bf16.msra.mxu0 %v1495
    %1561 = vmatprep.subr.bf16.mxu0 %v1498
    %1562 = vmatpush1.bf16.msra.mxu0 %v1497
    %1563 = vmatprep.subr.bf16.mxu0 %v1500
    %1564 = vmatpush1.bf16.msra.mxu0 %v1499
    %1565 = vmatprep.subr.bf16.mxu0 %v1502
    %1566 = vmatpush1.bf16.msra.mxu0 %v1501
    %1567 = vmatprep.mubr.bf16.mxu0 %v1324
    %1568 = vmatmul.mubr.bf16.gmra.mrb[0].mxu0 %v1323
    %v1569 = vpop.f32.mrb[0].mxu0
    %v1570 = vadd.f32 %v1368, %v1569
    %v1571 = vpop.f32.mrb[0].mxu0
    %v1572 = vadd.f32 %v1372, %v1571
    %v1573 = vpop.f32.mrb[0].mxu0
    %v1574 = vadd.f32 %v1368, %v1573
    %v1575 = vpop.f32.mrb[0].mxu0
    %v1576 = vadd.f32 %v1372, %v1575
    %1577 = vmatprep.mubr.bf16.mxu0 %v1326
    %1578 = vmatmul.mubr.bf16.gmra.mrb[0].mxu0 %v1325
    %v1579 = vpop.f32.mrb[0].mxu0
    %v1580 = vadd.f32 %v1368, %v1579
    %v1581 = vpop.f32.mrb[0].mxu0
    %v1582 = vadd.f32 %v1372, %v1581
    %v1583 = vpop.f32.mrb[0].mxu0
    %v1584 = vadd.f32 %v1368, %v1583
    %v1585 = vpop.f32.mrb[0].mxu0
    %v1586 = vadd.f32 %v1372, %v1585
    %1587 = vmatprep.mubr.bf16.mxu0 %v1328
    %1588 = vmatmul.mubr.bf16.gmra.mrb[0].mxu0 %v1327
    %v1589 = vpop.f32.mrb[0].mxu0
    %v1590 = vadd.f32 %v1368, %v1589
    %v1591 = vpop.f32.mrb[0].mxu0
    %v1592 = vadd.f32 %v1372, %v1591
    %v1593 = vpop.f32.mrb[0].mxu0
    %v1594 = vadd.f32 %v1368, %v1593
    %v1595 = vpop.f32.mrb[0].mxu0
    %v1596 = vadd.f32 %v1372, %v1595
    %1597 = vmatprep.mubr.bf16.mxu0 %v1330
    %1598 = vmatmul.mubr.bf16.gmra.mrb[0].mxu0 %v1329
    %v1599 = vpop.f32.mrb[0].mxu0
    %v1600 = vadd.f32 %v1368, %v1599
    %v1601 = vpop.f32.mrb[0].mxu0
    %v1602 = vadd.f32 %v1372, %v1601
    %v1603 = vpop.f32.mrb[0].mxu0
    %v1604 = vpop.f32.mrb[0].mxu0
    %1605 = vdwg.mxu0
    %v1606 = vmul.f32 %v1570, 0.5
    %v1607 = vmul.f32 %v1572, 0.5
    %v1608 = vmul.f32 %v1574, 0.5
    %v1609 = vmul.f32 %v1576, 0.5
    %v1610 = vmul.f32 %v1580, 0.5
    %v1611 = vmul.f32 %v1582, 0.5
    %v1612 = vmul.f32 %v1584, 0.5
    %v1613 = vmul.f32 %v1586, 0.5
    %v1614 = vmul.f32 %v1590, 0.5
    %v1615 = vmul.f32 %v1592, 0.5
    %v1616 = vmul.f32 %v1594, 0.5
    %v1617 = vmul.f32 %v1596, 0.5
    %v1618 = vmul.f32 %v1600, 0.5
    %v1619 = vmul.f32 %v1602, 0.5
    %v1620 = vmul.f32 %v1570, 0.70710677
    %v1621 = vmul.f32 %v1572, 0.70710677
    %v1622 = vmul.f32 %v1574, 0.70710677
    %v1623 = vmul.f32 %v1576, 0.70710677
    %v1624 = vmul.f32 %v1580, 0.70710677
    %v1625 = vmul.f32 %v1582, 0.70710677
    %v1626 = vmul.f32 %v1584, 0.70710677
    %v1627 = vmul.f32 %v1586, 0.70710677
    %v1628 = vmul.f32 %v1590, 0.70710677
    %v1629 = vmul.f32 %v1592, 0.70710677
    %v1630 = vmul.f32 %v1594, 0.70710677
    %v1631 = vmul.f32 %v1596, 0.70710677
    %v1632 = vmul.f32 %v1600, 0.70710677
    %v1633 = vmul.f32 %v1602, 0.70710677
    %v1634 = verf.f32.pop %v1620
    %v1635 = verf.f32.pop %v1621
    %v1636 = verf.f32.pop %v1622
    %v1637 = verf.f32.pop %v1623
    %v1638 = verf.f32.pop %v1624
    %v1639 = verf.f32.pop %v1625
    %v1640 = verf.f32.pop %v1626
    %v1641 = verf.f32.pop %v1627
    %v1642 = verf.f32.pop %v1628
    %v1643 = verf.f32.pop %v1629
    %v1644 = verf.f32.pop %v1630
    %v1645 = verf.f32.pop %v1631
    %v1646 = verf.f32.pop %v1632
    %v1647 = verf.f32.pop %v1633
    %v1648 = vadd.f32 %v1634, 1.0
    %v1649 = vadd.f32 %v1635, 1.0
    %v1650 = vadd.f32 %v1636, 1.0
    %v1651 = vadd.f32 %v1637, 1.0
    %v1652 = vadd.f32 %v1638, 1.0
    %v1653 = vadd.f32 %v1639, 1.0
    %v1654 = vadd.f32 %v1640, 1.0
    %v1655 = vadd.f32 %v1641, 1.0
    %v1656 = vadd.f32 %v1642, 1.0
    %v1657 = vadd.f32 %v1643, 1.0
    %v1658 = vadd.f32 %v1644, 1.0
    %v1659 = vadd.f32 %v1645, 1.0
    %v1660 = vadd.f32 %v1646, 1.0
    %v1661 = vadd.f32 %v1647, 1.0
    %v1662 = vmul.f32 %v1606, %v1648
    %v1663 = vmul.f32 %v1607, %v1649
    %v1664 = vmul.f32 %v1608, %v1650
    %v1665 = vmul.f32 %v1609, %v1651
    %v1666 = vmul.f32 %v1610, %v1652
    %v1667 = vmul.f32 %v1611, %v1653
    %v1668 = vmul.f32 %v1612, %v1654
    %v1669 = vmul.f32 %v1613, %v1655
    %v1670 = vmul.f32 %v1614, %v1656
    %v1671 = vmul.f32 %v1615, %v1657
    %v1672 = vmul.f32 %v1616, %v1658
    %v1673 = vmul.f32 %v1617, %v1659
    %v1674 = vmul.f32 %v1618, %v1660
    %v1675 = vmul.f32 %v1619, %v1661
    %v1676 = vpack.c.bf16 %v1664, %v1662
    %v1677 = vpack.c.bf16 %v1665, %v1663
    %v1678 = vpack.c.bf16 %v1668, %v1666
    %v1679 = vpack.c.bf16 %v1669, %v1667
    %v1680 = vpack.c.bf16 %v1672, %v1670
    %v1681 = vpack.c.bf16 %v1673, %v1671
    %v1682 = vpack.c.bf16 %v1674, %v1674
    %v1683 = vpack.c.bf16 %v1675, %v1675
    %v1684 = vld [vmem:[%s11] sm:$0xf]
    %v1685 = vld [vmem:[%s11 + $0x4] sm:$0xf]
    %v1686 = vld [vmem:[%s11 + $0x8] sm:$0xf]
    %v1687 = vld [vmem:[%s11 + $0xc] sm:$0xf]
    %v1688 = vld [vmem:[%s11 + $0x10] sm:$0xf]
    %v1689 = vld [vmem:[%s11 + $0x14] sm:$0xf]
    %v1690 = vld [vmem:[%s11 + $0x18] sm:$0xf]
    %v1691 = vld [vmem:[%s11 + $0x1c] sm:$0xf]
    %v1692 = vld [vmem:[%s11 + $0x20] sm:$0xf]
    %v1693 = vld [vmem:[%s11 + $0x24] sm:$0xf]
    %v1694 = vld [vmem:[%s11 + $0x28] sm:$0xf]
    %v1695 = vld [vmem:[%s11 + $0x2c] sm:$0xf]
    %v1696 = vld [vmem:[%s11 + $0x30] sm:$0xf]
    %v1697 = vld [vmem:[%s11 + $0x34] sm:$0xf]
    %v1698 = vld [vmem:[%s11 + $0x38] sm:$0xf]
    %v1699 = vld [vmem:[%s11 + $0x3c] sm:$0xf]
    %v1700 = vld [vmem:[%s11 + $0x40] sm:$0xf]
    %v1701 = vld [vmem:[%s11 + $0x44] sm:$0xf]
    %v1702 = vld [vmem:[%s11 + $0x48] sm:$0xf]
    %v1703 = vld [vmem:[%s11 + $0x4c] sm:$0xf]
    %v1704 = vld [vmem:[%s11 + $0x50] sm:$0xf]
    %v1705 = vld [vmem:[%s11 + $0x54] sm:$0xf]
    %v1706 = vld [vmem:[%s11 + $0x58] sm:$0xf]
    %v1707 = vld [vmem:[%s11 + $0x5c] sm:$0xf]
    %v1708 = vld [vmem:[%s11 + $0x60] sm:$0xf]
    %v1709 = vld [vmem:[%s11 + $0x64] sm:$0xf]
    %v1710 = vld [vmem:[%s11 + $0x68] sm:$0xf]
    %v1711 = vld [vmem:[%s11 + $0x6c] sm:$0xf]
    %v1712 = vld [vmem:[%s11 + $0x70] sm:$0xf]
    %v1713 = vld [vmem:[%s11 + $0x74] sm:$0xf]
    %v1714 = vld [vmem:[%s11 + $0x78] sm:$0xf]
    %v1715 = vld [vmem:[%s11 + $0x7c] sm:$0xf]
    %v1716 = vld [vmem:[%s12] sm:$0x1]
    %v1718 = vlaneseq
    %v1719 = vshrl.u32 %v1718, 7
    %v1720 = vsub.s32 0, %v1719
    %v1721 = vrot.slane %v1716, %v1720
    %v1755 = vunpack.c.l.b16 %v1684
    %v1756 = vunpack.c.l.b16 %v1685
    %v1757 = vunpack.c.l.b16 %v1686
    %v1758 = vunpack.c.l.b16 %v1687
    %v1759 = vunpack.c.l.b16 %v1688
    %v1760 = vunpack.c.l.b16 %v1689
    %v1761 = vunpack.c.l.b16 %v1690
    %v1762 = vunpack.c.l.b16 %v1691
    %v1763 = vunpack.c.l.b16 %v1692
    %v1764 = vunpack.c.l.b16 %v1693
    %v1765 = vunpack.c.l.b16 %v1694
    %v1766 = vunpack.c.l.b16 %v1695
    %v1767 = vunpack.c.l.b16 %v1696
    %v1768 = vunpack.c.l.b16 %v1697
    %v1769 = vunpack.c.l.b16 %v1698
    %v1770 = vunpack.c.l.b16 %v1699
    %v1771 = vunpack.c.l.b16 %v1700
    %v1772 = vunpack.c.l.b16 %v1701
    %v1773 = vunpack.c.l.b16 %v1702
    %v1774 = vunpack.c.l.b16 %v1703
    %v1775 = vunpack.c.l.b16 %v1704
    %v1776 = vunpack.c.l.b16 %v1705
    %v1777 = vunpack.c.l.b16 %v1706
    %v1778 = vunpack.c.l.b16 %v1707
    %v1779 = vunpack.c.l.b16 %v1708
    %v1780 = vunpack.c.l.b16 %v1709
    %v1781 = vunpack.c.l.b16 %v1710
    %v1782 = vunpack.c.l.b16 %v1711
    %v1783 = vunpack.c.l.b16 %v1712
    %v1784 = vunpack.c.l.b16 %v1713
    %v1785 = vunpack.c.l.b16 %v1714
    %v1786 = vunpack.c.l.b16 %v1715
    %v1787 = vpack.c.b16 %v1756, %v1755
    %v1788 = vpack.c.b16 %v1758, %v1757
    %v1789 = vpack.c.b16 %v1760, %v1759
    %v1790 = vpack.c.b16 %v1762, %v1761
    %v1791 = vpack.c.b16 %v1764, %v1763
    %v1792 = vpack.c.b16 %v1766, %v1765
    %v1793 = vpack.c.b16 %v1768, %v1767
    %v1794 = vpack.c.b16 %v1770, %v1769
    %v1795 = vpack.c.b16 %v1772, %v1771
    %v1796 = vpack.c.b16 %v1774, %v1773
    %v1797 = vpack.c.b16 %v1776, %v1775
    %v1798 = vpack.c.b16 %v1778, %v1777
    %v1799 = vpack.c.b16 %v1780, %v1779
    %v1800 = vpack.c.b16 %v1782, %v1781
    %v1801 = vpack.c.b16 %v1784, %v1783
    %v1802 = vpack.c.b16 %v1786, %v1785
    %1819 = vmatprep.subr.bf16.mxu0 0
    %1820 = vmatpush1.bf16.msra.mxu0 %v1787
    %1821 = vmatprep.subr.bf16.mxu0 0
    %1822 = vmatpush1.bf16.msra.mxu0 %v1788
    %1823 = vmatprep.subr.bf16.mxu0 0
    %1824 = vmatpush1.bf16.msra.mxu0 %v1789
    %1825 = vmatprep.subr.bf16.mxu0 0
    %1826 = vmatpush1.bf16.msra.mxu0 %v1790
    %1827 = vmatprep.subr.bf16.mxu0 0
    %1828 = vmatpush1.bf16.msra.mxu0 %v1791
    %1829 = vmatprep.subr.bf16.mxu0 0
    %1830 = vmatpush1.bf16.msra.mxu0 %v1792
    %1831 = vmatprep.subr.bf16.mxu0 0
    %1832 = vmatpush1.bf16.msra.mxu0 %v1793
    %1833 = vmatprep.subr.bf16.mxu0 0
    %1834 = vmatpush1.bf16.msra.mxu0 %v1794
    %1835 = vmatprep.subr.bf16.mxu0 0
    %1836 = vmatpush1.bf16.msra.mxu0 %v1795
    %1837 = vmatprep.subr.bf16.mxu0 0
    %1838 = vmatpush1.bf16.msra.mxu0 %v1796
    %1839 = vmatprep.subr.bf16.mxu0 0
    %1840 = vmatpush1.bf16.msra.mxu0 %v1797
    %1841 = vmatprep.subr.bf16.mxu0 0
    %1842 = vmatpush1.bf16.msra.mxu0 %v1798
    %1843 = vmatprep.subr.bf16.mxu0 0
    %1844 = vmatpush1.bf16.msra.mxu0 %v1799
    %1845 = vmatprep.subr.bf16.mxu0 0
    %1846 = vmatpush1.bf16.msra.mxu0 %v1800
    %1847 = vmatprep.subr.bf16.mxu0 0
    %1848 = vmatpush1.bf16.msra.mxu0 %v1801
    %1849 = vmatprep.subr.bf16.mxu0 0
    %1850 = vmatpush1.bf16.msra.mxu0 %v1802
    %1851 = vmatprep.mubr.bf16.mxu0 %v1677
    %1852 = vmatmul.mubr.bf16.gmra.mrb[0].mxu0 %v1676
    %v1853 = vpop.f32.mrb[0].mxu0
    %v1854 = vadd.f32 %v1721, %v1853
    %v1855 = vpop.f32.mrb[0].mxu0
    %v1856 = vpop.f32.mrb[0].mxu0
    %v1857 = vadd.f32 %v1721, %v1856
    %v1858 = vpop.f32.mrb[0].mxu0
    %1859 = vmatprep.mubr.bf16.mxu0 %v1679
    %1860 = vmatmul.mubr.bf16.gmra.mrb[0].mxu0 %v1678
    %v1861 = vpop.f32.mrb[0].mxu0
    %v1862 = vadd.f32 %v1721, %v1861
    %v1863 = vpop.f32.mrb[0].mxu0
    %v1864 = vpop.f32.mrb[0].mxu0
    %v1865 = vadd.f32 %v1721, %v1864
    %v1866 = vpop.f32.mrb[0].mxu0
    %1867 = vmatprep.mubr.bf16.mxu0 %v1681
    %1868 = vmatmul.mubr.bf16.gmra.mrb[0].mxu0 %v1680
    %v1869 = vpop.f32.mrb[0].mxu0
    %v1870 = vadd.f32 %v1721, %v1869
    %v1871 = vpop.f32.mrb[0].mxu0
    %v1872 = vpop.f32.mrb[0].mxu0
    %v1873 = vadd.f32 %v1721, %v1872
    %v1874 = vpop.f32.mrb[0].mxu0
    %1875 = vmatprep.mubr.bf16.mxu0 %v1683
    %1876 = vmatmul.mubr.bf16.gmra.mrb[0].mxu0 %v1682
    %v1877 = vpop.f32.mrb[0].mxu0
    %v1878 = vadd.f32 %v1721, %v1877
    %v1879 = vpop.f32.mrb[0].mxu0
    %v1880 = vpop.f32.mrb[0].mxu0
    %v1881 = vpop.f32.mrb[0].mxu0
    %1882 = vdwg.mxu0
    %vm1883 = vcmask 64512
    %1884 = vst.msk [vmem:[%s13] sm:$0xff] %vm1883, %v1854
    %1885 = vst.msk [vmem:[%s13 + $0x8] sm:$0xff] %vm1883, %v1857
    %1886 = vst.msk [vmem:[%s13 + $0x10] sm:$0xff] %vm1883, %v1862
    %1887 = vst.msk [vmem:[%s13 + $0x18] sm:$0xff] %vm1883, %v1865
    %1888 = vst.msk [vmem:[%s13 + $0x20] sm:$0xff] %vm1883, %v1870
    %1889 = vst.msk [vmem:[%s13 + $0x28] sm:$0xff] %vm1883, %v1873
    %1890 = vst.msk [vmem:[%s13 + $0x30] sm:$0xff] %vm1883, %v1878
    // Predicated region
    $region70: #{tpu_custom_call.1} parent=1 // pred_check
      _
    $region71: #{tpu_custom_call.1} parent=1 // pred_check_branch
      %1892 = sbr.rel (0) target = $region73
    $region72: #{tpu_custom_call.1} parent=1 // pred_region
      _
    $region73: #{tpu_custom_call.1} parent=1 // pred_fallthru
      _
    // Predicated region
    $region74: #{tpu_custom_call.1} parent=1 // pred_check
      _
    $region75: #{tpu_custom_call.1} parent=1 // pred_check_branch
      %1894 = sbr.rel (0) target = $region77
    $region76: #{tpu_custom_call.1} parent=1 // pred_region
      _
    $region77: #{tpu_custom_call.1} parent=1 // pred_fallthru
      _
    %1895 = vsyncpa [#allocation3], 1
    %1896 = vsyncpa [#allocation5], 1
    %1897 = vsyncpa [#allocation8], 1

</llo_original>
